<compile_context>
chip_gen: v6e
topology: v6e:2x2x1
jax: 0.10.0
libtpu: 0.0.40
codegen_flags: <defaults>
</compile_context>

<pallas_src>
import jax
import jax.numpy as jnp
from jax.experimental import pallas as pl
from jax.experimental.pallas import tpu as pltpu

D_IN = 256
D_HID = 2 * 256   # 512
D_OUT = 256

NEG_SLOPE = 0.1


def _leaky_relu(x, neg_slope=NEG_SLOPE):
    return jnp.where(x > 0, x, neg_slope * x)


def fcn_qnet_kernel(x_ref, w1_ref, b1_ref, w2_ref, b2_ref, w3_ref, b3_ref, o_ref):
    # Matmuls on the MXU in bf16 with f32 accumulation; bias adds and the
    # leaky_relu stay in f32 on the VPU.
    x = x_ref[...].astype(jnp.bfloat16)
    h1 = jnp.dot(x, w1_ref[...], preferred_element_type=jnp.float32) + b1_ref[...]
    h1 = _leaky_relu(h1)
    h2 = jnp.dot(h1.astype(jnp.bfloat16), w2_ref[...],
                 preferred_element_type=jnp.float32) + b2_ref[...]
    h2 = _leaky_relu(h2)
    h3 = jnp.dot(h2.astype(jnp.bfloat16), w3_ref[...],
                 preferred_element_type=jnp.float32) + b3_ref[...]
    o_ref[...] = h3.astype(o_ref.dtype)


def fcn_qnet_forward(x, params, *, batch_tile=256):
    """x: (B, 256) float32 -> (B, 256) float32.  Handles ragged B via padding."""
    w1, b1, w2, b2, w3, b3 = params
    B = x.shape[0]
    assert x.shape == (B, D_IN)

    # Round the batch up to a sublane multiple; small batches run in a single
    # grid step, large batches use `batch_tile`-row tiles (MXU-filling, and a
    # parallel grid axis that shards across TensorCores on multi-TC chips).
    bp = ((B + 7) // 8) * 8
    if bp <= batch_tile:
        tile = bp
    else:
        tile = batch_tile
        bp = ((B + tile - 1) // tile) * tile
    if bp != B:
        x = jnp.pad(x, ((0, bp - B), (0, 0)))
    grid = (bp // tile,)

    # MXU fast path: bf16 weights, f32 accumulation. Biases stay f32.
    w1b, w2b, w3b = (w.astype(jnp.bfloat16) for w in (w1, w2, w3))

    def batch_map(i):
        return (i, 0)

    def const_map(i):
        return (0, 0)

    matmul_macs = D_IN * D_HID + D_HID * D_HID + D_HID * D_OUT
    weight_bytes = 2 * matmul_macs                       # bf16 weights
    bias_bytes = 4 * (D_HID + D_HID + D_OUT)             # f32 biases
    cost = pl.CostEstimate(
        flops=2 * bp * matmul_macs,
        transcendentals=0,
        bytes_accessed=4 * bp * D_IN + 4 * bp * D_OUT + weight_bytes + bias_bytes,
    )

    out = pl.pallas_call(
        fcn_qnet_kernel,
        out_shape=jax.ShapeDtypeStruct((bp, D_OUT), jnp.float32),
        grid_spec=pltpu.PrefetchScalarGridSpec(
            num_scalar_prefetch=0,
            grid=grid,
            in_specs=[
                pl.BlockSpec((tile, D_IN), batch_map),    # x tile (f32)
                pl.BlockSpec((D_IN, D_HID), const_map),   # W1 (bf16, resident)
                pl.BlockSpec((1, D_HID), const_map),      # b1 (f32)
                pl.BlockSpec((D_HID, D_HID), const_map),  # W2 (bf16, resident)
                pl.BlockSpec((1, D_HID), const_map),      # b2 (f32)
                pl.BlockSpec((D_HID, D_OUT), const_map),  # W3 (bf16, resident)
                pl.BlockSpec((1, D_OUT), const_map),      # b3 (f32)
            ],
            out_specs=pl.BlockSpec((tile, D_OUT), batch_map),
        ),
        compiler_params=pltpu.CompilerParams(
            dimension_semantics=("parallel",),
            vmem_limit_bytes=32 * 1024 * 1024,
        ),
        cost_estimate=cost,
    )(x, w1b, b1, w2b, b2, w3b, b3)

    return out[:B] if bp != B else out


def make_params(key):
    # Deterministic synthetic init matching PyTorch's default Linear init
    # scale: W, b ~ U(-1/sqrt(fan_in), 1/sqrt(fan_in)).  (In the original
    # module, init_params() runs BEFORE the Linear layers are created, so the
    # layers keep PyTorch's default init.)
    def lin(k, fan_in, fan_out):
        kw, kb = jax.random.split(k)
        bound = 1.0 / jnp.sqrt(fan_in)
        w = jax.random.uniform(kw, (fan_in, fan_out), jnp.float32, -bound, bound)
        b = jax.random.uniform(kb, (1, fan_out), jnp.float32, -bound, bound)
        return w, b

    k1, k2, k3 = jax.random.split(key, 3)
    w1, b1 = lin(k1, D_IN, D_HID)
    w2, b2 = lin(k2, D_HID, D_HID)
    w3, b3 = lin(k3, D_HID, D_OUT)
    return (w1, b1, w2, b2, w3, b3)


def reference_forward(x, params):
    w1, b1, w2, b2, w3, b3 = params
    h = _leaky_relu(x @ w1 + b1)
    h = _leaky_relu(h @ w2 + b2)
    y = h @ w3 + b3
    return y.reshape(y.shape[0], -1)  # flatten(1): no-op for 2-D input


if __name__ == "__main__":
    key = jax.random.PRNGKey(0)
    kx, kp = jax.random.split(key)
    params = make_params(kp)

    # Small batch, a ragged batch (exercises padding), and a multi-tile batch.
    for batch in (2, 20, 512):
        x = jax.random.normal(jax.random.fold_in(kx, batch), (batch, D_IN), jnp.float32)
        out = jax.block_until_ready(fcn_qnet_forward(x, params))
        ref = reference_forward(x, params)
        assert out.shape == (batch, D_OUT)
        # bf16 matmul inputs -> loosened tolerance vs the f32 reference (expected).
        assert jnp.allclose(out, ref, atol=3e-2, rtol=3e-2), f"mismatch vs reference (B={batch})"

    print("KERNEL_OK")
</pallas_src>

<mosaic_0001>
module attributes {stable_mosaic.version = 11 : i64} {
  func.func @fcn_qnet_kernel(%arg0: i32, %arg1: memref<8x256xf32, #tpu.memory_space<vmem>>, %arg2: memref<256x512xbf16, #tpu.memory_space<vmem>>, %arg3: memref<1x512xf32, #tpu.memory_space<vmem>>, %arg4: memref<512x512xbf16, #tpu.memory_space<vmem>>, %arg5: memref<1x512xf32, #tpu.memory_space<vmem>>, %arg6: memref<512x256xbf16, #tpu.memory_space<vmem>>, %arg7: memref<1x256xf32, #tpu.memory_space<vmem>>, %arg8: memref<8x256xf32, #tpu.memory_space<vmem>>) attributes {dimension_semantics = [#tpu.dimension_semantics<parallel>], iteration_bounds = array<i64: 1>, scalar_prefetch = 0 : i64, scratch_operands = 0 : i64, tpu.core_type = #tpu.core_type<tc>, window_params = [{transform_indices = @transform_0, window_bounds = array<i64: 8, 256>}, {pipeline_mode = #tpu.pipeline_mode<synchronous>, transform_indices = @transform_1, window_bounds = array<i64: 256, 512>}, {pipeline_mode = #tpu.pipeline_mode<synchronous>, transform_indices = @transform_2, window_bounds = array<i64: 1, 512>}, {pipeline_mode = #tpu.pipeline_mode<synchronous>, transform_indices = @transform_3, window_bounds = array<i64: 512, 512>}, {pipeline_mode = #tpu.pipeline_mode<synchronous>, transform_indices = @transform_4, window_bounds = array<i64: 1, 512>}, {pipeline_mode = #tpu.pipeline_mode<synchronous>, transform_indices = @transform_5, window_bounds = array<i64: 512, 256>}, {pipeline_mode = #tpu.pipeline_mode<synchronous>, transform_indices = @transform_6, window_bounds = array<i64: 1, 256>}, {transform_indices = @transform_7, window_bounds = array<i64: 8, 256>}]} {
    %c0 = arith.constant 0 : index
    %c0_0 = arith.constant 0 : index
    %0 = vector.load %arg1[%c0, %c0_0] : memref<8x256xf32, #tpu.memory_space<vmem>>, vector<8x256xf32>
    %1 = arith.truncf %0 : vector<8x256xf32> to vector<8x256xbf16>
    %c0_1 = arith.constant 0 : index
    %c0_2 = arith.constant 0 : index
    %2 = vector.load %arg2[%c0_1, %c0_2] : memref<256x512xbf16, #tpu.memory_space<vmem>>, vector<256x512xbf16>
    %cst = arith.constant dense<0.000000e+00> : vector<8x512xf32>
    %3 = tpu.matmul %1, %2, %cst {dimension_numbers = #tpu.dot_dimension_numbers<[1], [0], [0], [1], [0, 0, 1, 1], [], []>} : vector<8x256xbf16>, vector<256x512xbf16>, vector<8x512xf32> -> vector<8x512xf32>
    %c0_3 = arith.constant 0 : index
    %c0_4 = arith.constant 0 : index
    %4 = vector.load %arg3[%c0_3, %c0_4] : memref<1x512xf32, #tpu.memory_space<vmem>>, vector<1x512xf32>
    %5 = vector.broadcast %4 : vector<1x512xf32> to vector<8x512xf32>
    %6 = arith.addf %3, %5 : vector<8x512xf32>
    %cst_5 = arith.constant 0.000000e+00 : f32
    %7 = vector.broadcast %cst_5 : f32 to vector<8x512xf32>
    %8 = arith.cmpf ogt, %6, %7 : vector<8x512xf32>
    %cst_6 = arith.constant 1.000000e-01 : f32
    %9 = vector.broadcast %cst_6 : f32 to vector<8x512xf32>
    %10 = arith.mulf %9, %6 : vector<8x512xf32>
    %11 = arith.select %8, %6, %10 : vector<8x512xi1>, vector<8x512xf32>
    %12 = arith.truncf %11 : vector<8x512xf32> to vector<8x512xbf16>
    %c0_7 = arith.constant 0 : index
    %c0_8 = arith.constant 0 : index
    %13 = vector.load %arg4[%c0_7, %c0_8] : memref<512x512xbf16, #tpu.memory_space<vmem>>, vector<512x512xbf16>
    %cst_9 = arith.constant dense<0.000000e+00> : vector<8x512xf32>
    %14 = tpu.matmul %12, %13, %cst_9 {dimension_numbers = #tpu.dot_dimension_numbers<[1], [0], [0], [1], [0, 0, 1, 1], [], []>} : vector<8x512xbf16>, vector<512x512xbf16>, vector<8x512xf32> -> vector<8x512xf32>
    %c0_10 = arith.constant 0 : index
    %c0_11 = arith.constant 0 : index
    %15 = vector.load %arg5[%c0_10, %c0_11] : memref<1x512xf32, #tpu.memory_space<vmem>>, vector<1x512xf32>
    %16 = vector.broadcast %15 : vector<1x512xf32> to vector<8x512xf32>
    %17 = arith.addf %14, %16 : vector<8x512xf32>
    %cst_12 = arith.constant 0.000000e+00 : f32
    %18 = vector.broadcast %cst_12 : f32 to vector<8x512xf32>
    %19 = arith.cmpf ogt, %17, %18 : vector<8x512xf32>
    %cst_13 = arith.constant 1.000000e-01 : f32
    %20 = vector.broadcast %cst_13 : f32 to vector<8x512xf32>
    %21 = arith.mulf %20, %17 : vector<8x512xf32>
    %22 = arith.select %19, %17, %21 : vector<8x512xi1>, vector<8x512xf32>
    %23 = arith.truncf %22 : vector<8x512xf32> to vector<8x512xbf16>
    %c0_14 = arith.constant 0 : index
    %c0_15 = arith.constant 0 : index
    %24 = vector.load %arg6[%c0_14, %c0_15] : memref<512x256xbf16, #tpu.memory_space<vmem>>, vector<512x256xbf16>
    %cst_16 = arith.constant dense<0.000000e+00> : vector<8x256xf32>
    %25 = tpu.matmul %23, %24, %cst_16 {dimension_numbers = #tpu.dot_dimension_numbers<[1], [0], [0], [1], [0, 0, 1, 1], [], []>} : vector<8x512xbf16>, vector<512x256xbf16>, vector<8x256xf32> -> vector<8x256xf32>
    %c0_17 = arith.constant 0 : index
    %c0_18 = arith.constant 0 : index
    %26 = vector.load %arg7[%c0_17, %c0_18] : memref<1x256xf32, #tpu.memory_space<vmem>>, vector<1x256xf32>
    %27 = vector.broadcast %26 : vector<1x256xf32> to vector<8x256xf32>
    %28 = arith.addf %25, %27 : vector<8x256xf32>
    %c0_19 = arith.constant 0 : index
    %c0_20 = arith.constant 0 : index
    %29 = vector.load %arg8[%c0_19, %c0_20] : memref<8x256xf32, #tpu.memory_space<vmem>>, vector<8x256xf32>
    tpu.vector_store %arg8[%c0_19, %c0_20], %28 {strides = array<i32>} : memref<8x256xf32, #tpu.memory_space<vmem>>, vector<8x256xf32>,
    return
  }
  func.func @transform_0(%arg0: i32) -> (i32, i32) {
    %c0_i32 = arith.constant 0 : i32
    %c0_i32_0 = arith.constant 0 : i32
    return %arg0, %c0_i32 : i32, i32
  }
  func.func @transform_1(%arg0: i32) -> (i32, i32) {
    %c0_i32 = arith.constant 0 : i32
    %c0_i32_0 = arith.constant 0 : i32
    %c0_i32_1 = arith.constant 0 : i32
    return %c0_i32, %c0_i32_0 : i32, i32
  }
  func.func @transform_2(%arg0: i32) -> (i32, i32) {
    %c0_i32 = arith.constant 0 : i32
    %c0_i32_0 = arith.constant 0 : i32
    %c0_i32_1 = arith.constant 0 : i32
    return %c0_i32, %c0_i32_0 : i32, i32
  }
  func.func @transform_3(%arg0: i32) -> (i32, i32) {
    %c0_i32 = arith.constant 0 : i32
    %c0_i32_0 = arith.constant 0 : i32
    %c0_i32_1 = arith.constant 0 : i32
    return %c0_i32, %c0_i32_0 : i32, i32
  }
  func.func @transform_4(%arg0: i32) -> (i32, i32) {
    %c0_i32 = arith.constant 0 : i32
    %c0_i32_0 = arith.constant 0 : i32
    %c0_i32_1 = arith.constant 0 : i32
    return %c0_i32, %c0_i32_0 : i32, i32
  }
  func.func @transform_5(%arg0: i32) -> (i32, i32) {
    %c0_i32 = arith.constant 0 : i32
    %c0_i32_0 = arith.constant 0 : i32
    %c0_i32_1 = arith.constant 0 : i32
    return %c0_i32, %c0_i32_0 : i32, i32
  }
  func.func @transform_6(%arg0: i32) -> (i32, i32) {
    %c0_i32 = arith.constant 0 : i32
    %c0_i32_0 = arith.constant 0 : i32
    %c0_i32_1 = arith.constant 0 : i32
    return %c0_i32, %c0_i32_0 : i32, i32
  }
  func.func @transform_7(%arg0: i32) -> (i32, i32) {
    %c0_i32 = arith.constant 0 : i32
    %c0_i32_0 = arith.constant 0 : i32
    return %arg0, %c0_i32 : i32, i32
  }
}

</mosaic_0001>

<llo_original>
// kernel: tpu_custom_call.1
$region0: #{tpu_custom_call.1}
  #allocation0 [shape = 'u32[]', space=smem, size = 0x4, offset = 0x4, fixed_abs, tag = 'smem constant byte address 0x4 - core index']
  #allocation1 [shape = 'u32[144,128]{1,0:T(1,128)}', space=vmem, size = 0x12000, scoped, tag = 'internal scratch']
  %s0 = inlined_call_operand.hbm [shape: f32[8,256], index: 0, kind: input, shape index: {}]
  %s1 = inlined_call_operand.hbm [shape: bf16[256,512], index: 1, kind: input, shape index: {}]
  %s2 = inlined_call_operand.hbm [shape: f32[1,512], index: 2, kind: input, shape index: {}]
  %s3 = inlined_call_operand.hbm [shape: bf16[512,512], index: 3, kind: input, shape index: {}]
  %s4 = inlined_call_operand.vmem [shape: f32[1,512], index: 4, kind: input, shape index: {}]
  %s5 = inlined_call_operand.hbm [shape: bf16[512,256], index: 5, kind: input, shape index: {}]
  %s6 = inlined_call_operand.vmem [shape: f32[1,256], index: 6, kind: input, shape index: {}]
  %s7 = inlined_call_operand.hbm [shape: f32[8,256], index: 7, kind: output, shape index: {}]
  %s8 = sld [smem:[#allocation0]]
  $region58: #{tpu_custom_call.1} parent=0
    _
  %s10 = ssub.s32 1, %s8
  %s11 = scalar_select 0, %s10, %s8
  $region1: #{tpu_custom_call.1} parent=0
    #allocation2 [shape = 'u8[8192]{0}', space=vmem, size = 0x2000, scoped, tag = 'input window, operand 0, single buffered']
    #allocation3 [shape = 's32[1]{0}', space=sflag, size = 0x4, scoped, tag = 'scoped memory for tpu_custom_call.1']
    #allocation4 [shape = 's32[1]{0}', space=sflag, size = 0x4, scoped, tag = 'scoped memory for tpu_custom_call.1']
    #allocation5 [shape = 'u8[262144]{0}', space=vmem, size = 0x40000, scoped, tag = 'input window, operand 1, single buffered']
    #allocation6 [shape = 's32[1]{0}', space=sflag, size = 0x4, scoped, tag = 'scoped memory for tpu_custom_call.1']
    #allocation7 [shape = 'u8[2048]{0}', space=vmem, size = 0x800, scoped, tag = 'input window, operand 2, single buffered']
    #allocation8 [shape = 'u8[524288]{0}', space=vmem, size = 0x80000, scoped, tag = 'input window, operand 3, single buffered']
    #allocation9 [shape = 's32[1]{0}', space=sflag, size = 0x4, scoped, tag = 'scoped memory for tpu_custom_call.1']
    #allocation10 [shape = 'u8[262144]{0}', space=vmem, size = 0x40000, scoped, tag = 'input window, operand 5, single buffered']
    #allocation11 [shape = 'u8[8192]{0}', space=vmem, size = 0x2000, scoped, tag = 'output window, operand 0, single buffered']
    %12 = vsyncpa [#allocation3], 0
    %13 = vsyncpa [#allocation6], 0
    %14 = vsyncpa [#allocation9], 0
    %15 = vsyncpa [#allocation4], 0
    // Predicated region
    $region2: #{tpu_custom_call.1} parent=1 // pred_check
      _
    $region3: #{tpu_custom_call.1} parent=1 // pred_check_branch
      %17 = sbr.rel (0) target = $region5
    $region4: #{tpu_custom_call.1} parent=1 // pred_region
      %s19 = ssub.s32 256, 256
      %20 = vsyncadd [#allocation3], %s19
      %s22 = sshll.u32 [#allocation2], 4
      %s23 = int_to_ptr.vmem [resolvable:$true] %s22
      %25 = dma.hbm_to_vmem [thread:$0]  %s0, 256, %s23, [#allocation3]
    $region5: #{tpu_custom_call.1} parent=1 // pred_fallthru
      _
    // Predicated region
    $region6: #{tpu_custom_call.1} parent=1 // pred_check
      _
    $region7: #{tpu_custom_call.1} parent=1 // pred_check_branch
      %27 = sbr.rel (0) target = $region9
    $region8: #{tpu_custom_call.1} parent=1 // pred_region
      %s29 = ssub.s32 8192, 8192
      %30 = vsyncadd [#allocation6], %s29
      %s31 = sshll.u32 [#allocation5], 4
      %s32 = int_to_ptr.vmem [resolvable:$true] %s31
      %37 = dma.hbm_to_vmem [thread:$0]  %s1, 8192, %s32, [#allocation6], 256, 256, 16
    $region9: #{tpu_custom_call.1} parent=1 // pred_fallthru
      _
    // Predicated region
    $region10: #{tpu_custom_call.1} parent=1 // pred_check
      _
    $region11: #{tpu_custom_call.1} parent=1 // pred_check_branch
      %39 = sbr.rel (0) target = $region13
    $region12: #{tpu_custom_call.1} parent=1 // pred_region
      %s41 = ssub.s32 64, 64
      %42 = vsyncadd [#allocation6], %s41
      %s44 = sshll.u32 [#allocation7], 4
      %s45 = int_to_ptr.vmem [resolvable:$true] %s44
      %47 = dma.hbm_to_vmem [thread:$0]  %s2, 64, %s45, [#allocation6]
    $region13: #{tpu_custom_call.1} parent=1 // pred_fallthru
      _
    // Predicated region
    $region14: #{tpu_custom_call.1} parent=1 // pred_check
      _
    $region15: #{tpu_custom_call.1} parent=1 // pred_check_branch
      %49 = sbr.rel (0) target = $region17
    $region16: #{tpu_custom_call.1} parent=1 // pred_region
      %s51 = ssub.s32 16384, 16384
      %52 = vsyncadd [#allocation9], %s51
      %s53 = sshll.u32 [#allocation8], 4
      %s54 = int_to_ptr.vmem [resolvable:$true] %s53
      %59 = dma.hbm_to_vmem [thread:$0]  %s3, 16384, %s54, [#allocation9], 256, 256, 16
    $region17: #{tpu_custom_call.1} parent=1 // pred_fallthru
      _
    // Predicated region
    $region18: #{tpu_custom_call.1} parent=1 // pred_check
      _
    $region19: #{tpu_custom_call.1} parent=1 // pred_check_branch
      %61 = sbr.rel (0) target = $region21
    $region20: #{tpu_custom_call.1} parent=1 // pred_region
      _
    $region21: #{tpu_custom_call.1} parent=1 // pred_fallthru
      _
    // Predicated region
    $region22: #{tpu_custom_call.1} parent=1 // pred_check
      _
    $region23: #{tpu_custom_call.1} parent=1 // pred_check_branch
      %63 = sbr.rel (0) target = $region25
    $region24: #{tpu_custom_call.1} parent=1 // pred_region
      %s65 = ssub.s32 8192, 8192
      %66 = vsyncadd [#allocation9], %s65
      %s67 = sshll.u32 [#allocation10], 4
      %s68 = int_to_ptr.vmem [resolvable:$true] %s67
      %73 = dma.hbm_to_vmem [thread:$0]  %s5, 8192, %s68, [#allocation9], 128, 128, 8
    $region25: #{tpu_custom_call.1} parent=1 // pred_fallthru
      _
    // Predicated region
    $region26: #{tpu_custom_call.1} parent=1 // pred_check
      _
    $region27: #{tpu_custom_call.1} parent=1 // pred_check_branch
      %75 = sbr.rel (0) target = $region29
    $region28: #{tpu_custom_call.1} parent=1 // pred_region
      _
    $region29: #{tpu_custom_call.1} parent=1 // pred_fallthru
      _
    // Predicated region
    $region30: #{tpu_custom_call.1} parent=1 // pred_check
      _
    $region31: #{tpu_custom_call.1} parent=1 // pred_check_branch
      %77 = sbr.rel (0) target = $region33
    $region32: #{tpu_custom_call.1} parent=1 // pred_region
      %78 = dma.done [#allocation3], 256
    $region33: #{tpu_custom_call.1} parent=1 // pred_fallthru
      _
    // Predicated region
    $region34: #{tpu_custom_call.1} parent=1 // pred_check
      _
    $region35: #{tpu_custom_call.1} parent=1 // pred_check_branch
      %80 = sbr.rel (0) target = $region37
    $region36: #{tpu_custom_call.1} parent=1 // pred_region
      %81 = dma.done [#allocation6], 8192
    $region37: #{tpu_custom_call.1} parent=1 // pred_fallthru
      _
    // Predicated region
    $region38: #{tpu_custom_call.1} parent=1 // pred_check
      _
    $region39: #{tpu_custom_call.1} parent=1 // pred_check_branch
      %83 = sbr.rel (0) target = $region41
    $region40: #{tpu_custom_call.1} parent=1 // pred_region
      %84 = dma.done [#allocation6], 64
    $region41: #{tpu_custom_call.1} parent=1 // pred_fallthru
      _
    // Predicated region
    $region42: #{tpu_custom_call.1} parent=1 // pred_check
      _
    $region43: #{tpu_custom_call.1} parent=1 // pred_check_branch
      %86 = sbr.rel (0) target = $region45
    $region44: #{tpu_custom_call.1} parent=1 // pred_region
      %87 = dma.done [#allocation9], 16384
    $region45: #{tpu_custom_call.1} parent=1 // pred_fallthru
      _
    // Predicated region
    $region46: #{tpu_custom_call.1} parent=1 // pred_check
      _
    $region47: #{tpu_custom_call.1} parent=1 // pred_check_branch
      %89 = sbr.rel (0) target = $region49
    $region48: #{tpu_custom_call.1} parent=1 // pred_region
      %90 = dma.done [#allocation9], 8192
    $region49: #{tpu_custom_call.1} parent=1 // pred_fallthru
      _
    %v91 = vld [vmem:[#allocation2] sm:$0xff]
    %v92 = vld [vmem:[#allocation2 + $0x8] sm:$0xff]
    %v93 = vpack.c.bf16 %v91, %v91
    %v94 = vpack.c.bf16 %v92, %v92
    %v95 = vld [vmem:[#allocation5] sm:$0xff]
    %v96 = vld [vmem:[#allocation5 + $0x8] sm:$0xff]
    %v97 = vld [vmem:[#allocation5 + $0x10] sm:$0xff]
    %v98 = vld [vmem:[#allocation5 + $0x18] sm:$0xff]
    %v99 = vld [vmem:[#allocation5 + $0x20] sm:$0xff]
    %v100 = vld [vmem:[#allocation5 + $0x28] sm:$0xff]
    %v101 = vld [vmem:[#allocation5 + $0x30] sm:$0xff]
    %v102 = vld [vmem:[#allocation5 + $0x38] sm:$0xff]
    %v103 = vld [vmem:[#allocation5 + $0x40] sm:$0xff]
    %v104 = vld [vmem:[#allocation5 + $0x48] sm:$0xff]
    %v105 = vld [vmem:[#allocation5 + $0x50] sm:$0xff]
    %v106 = vld [vmem:[#allocation5 + $0x58] sm:$0xff]
    %v107 = vld [vmem:[#allocation5 + $0x60] sm:$0xff]
    %v108 = vld [vmem:[#allocation5 + $0x68] sm:$0xff]
    %v109 = vld [vmem:[#allocation5 + $0x70] sm:$0xff]
    %v110 = vld [vmem:[#allocation5 + $0x78] sm:$0xff]
    %v111 = vld [vmem:[#allocation5 + $0x80] sm:$0xff]
    %v112 = vld [vmem:[#allocation5 + $0x88] sm:$0xff]
    %v113 = vld [vmem:[#allocation5 + $0x90] sm:$0xff]
    %v114 = vld [vmem:[#allocation5 + $0x98] sm:$0xff]
    %v115 = vld [vmem:[#allocation5 + $0xa0] sm:$0xff]
    %v116 = vld [vmem:[#allocation5 + $0xa8] sm:$0xff]
    %v117 = vld [vmem:[#allocation5 + $0xb0] sm:$0xff]
    %v118 = vld [vmem:[#allocation5 + $0xb8] sm:$0xff]
    %v119 = vld [vmem:[#allocation5 + $0xc0] sm:$0xff]
    %v120 = vld [vmem:[#allocation5 + $0xc8] sm:$0xff]
    %v121 = vld [vmem:[#allocation5 + $0xd0] sm:$0xff]
    %v122 = vld [vmem:[#allocation5 + $0xd8] sm:$0xff]
    %v123 = vld [vmem:[#allocation5 + $0xe0] sm:$0xff]
    %v124 = vld [vmem:[#allocation5 + $0xe8] sm:$0xff]
    %v125 = vld [vmem:[#allocation5 + $0xf0] sm:$0xff]
    %v126 = vld [vmem:[#allocation5 + $0xf8] sm:$0xff]
    %v127 = vld [vmem:[#allocation5 + $0x100] sm:$0xff]
    %v128 = vld [vmem:[#allocation5 + $0x108] sm:$0xff]
    %v129 = vld [vmem:[#allocation5 + $0x110] sm:$0xff]
    %v130 = vld [vmem:[#allocation5 + $0x118] sm:$0xff]
    %v131 = vld [vmem:[#allocation5 + $0x120] sm:$0xff]
    %v132 = vld [vmem:[#allocation5 + $0x128] sm:$0xff]
    %v133 = vld [vmem:[#allocation5 + $0x130] sm:$0xff]
    %v134 = vld [vmem:[#allocation5 + $0x138] sm:$0xff]
    %v135 = vld [vmem:[#allocation5 + $0x140] sm:$0xff]
    %v136 = vld [vmem:[#allocation5 + $0x148] sm:$0xff]
    %v137 = vld [vmem:[#allocation5 + $0x150] sm:$0xff]
    %v138 = vld [vmem:[#allocation5 + $0x158] sm:$0xff]
    %v139 = vld [vmem:[#allocation5 + $0x160] sm:$0xff]
    %v140 = vld [vmem:[#allocation5 + $0x168] sm:$0xff]
    %v141 = vld [vmem:[#allocation5 + $0x170] sm:$0xff]
    %v142 = vld [vmem:[#allocation5 + $0x178] sm:$0xff]
    %v143 = vld [vmem:[#allocation5 + $0x180] sm:$0xff]
    %v144 = vld [vmem:[#allocation5 + $0x188] sm:$0xff]
    %v145 = vld [vmem:[#allocation5 + $0x190] sm:$0xff]
    %v146 = vld [vmem:[#allocation5 + $0x198] sm:$0xff]
    %v147 = vld [vmem:[#allocation5 + $0x1a0] sm:$0xff]
    %v148 = vld [vmem:[#allocation5 + $0x1a8] sm:$0xff]
    %v149 = vld [vmem:[#allocation5 + $0x1b0] sm:$0xff]
    %v150 = vld [vmem:[#allocation5 + $0x1b8] sm:$0xff]
    %v151 = vld [vmem:[#allocation5 + $0x1c0] sm:$0xff]
    %v152 = vld [vmem:[#allocation5 + $0x1c8] sm:$0xff]
    %v153 = vld [vmem:[#allocation5 + $0x1d0] sm:$0xff]
    %v154 = vld [vmem:[#allocation5 + $0x1d8] sm:$0xff]
    %v155 = vld [vmem:[#allocation5 + $0x1e0] sm:$0xff]
    %v156 = vld [vmem:[#allocation5 + $0x1e8] sm:$0xff]
    %v157 = vld [vmem:[#allocation5 + $0x1f0] sm:$0xff]
    %v158 = vld [vmem:[#allocation5 + $0x1f8] sm:$0xff]
    %v159 = vld [vmem:[#allocation7] sm:$0xf]
    %v161 = vlaneseq
    %v162 = vshrl.u32 %v161, 7
    %v163 = vsub.s32 0, %v162
    %v164 = vrot.slane %v159, %v163
    %v165 = vlaneseq
    %v166 = vshrl.u32 %v165, 7
    %v167 = vsub.s32 1, %v166
    %v168 = vrot.slane %v159, %v167
    %v169 = vlaneseq
    %v170 = vshrl.u32 %v169, 7
    %v171 = vsub.s32 2, %v170
    %v172 = vrot.slane %v159, %v171
    %v173 = vlaneseq
    %v174 = vshrl.u32 %v173, 7
    %v175 = vsub.s32 3, %v174
    %v176 = vrot.slane %v159, %v175
    %v245 = vunpack.c.l.b16 %v95
    %v246 = vunpack.c.h.b16 %v95
    %v247 = vunpack.c.l.b16 %v96
    %v248 = vunpack.c.h.b16 %v96
    %v249 = vunpack.c.l.b16 %v97
    %v250 = vunpack.c.h.b16 %v97
    %v251 = vunpack.c.l.b16 %v98
    %v252 = vunpack.c.h.b16 %v98
    %v253 = vunpack.c.l.b16 %v99
    %v254 = vunpack.c.h.b16 %v99
    %v255 = vunpack.c.l.b16 %v100
    %v256 = vunpack.c.h.b16 %v100
    %v257 = vunpack.c.l.b16 %v101
    %v258 = vunpack.c.h.b16 %v101
    %v259 = vunpack.c.l.b16 %v102
    %v260 = vunpack.c.h.b16 %v102
    %v261 = vunpack.c.l.b16 %v103
    %v262 = vunpack.c.h.b16 %v103
    %v263 = vunpack.c.l.b16 %v104
    %v264 = vunpack.c.h.b16 %v104
    %v265 = vunpack.c.l.b16 %v105
    %v266 = vunpack.c.h.b16 %v105
    %v267 = vunpack.c.l.b16 %v106
    %v268 = vunpack.c.h.b16 %v106
    %v269 = vunpack.c.l.b16 %v107
    %v270 = vunpack.c.h.b16 %v107
    %v271 = vunpack.c.l.b16 %v108
    %v272 = vunpack.c.h.b16 %v108
    %v273 = vunpack.c.l.b16 %v109
    %v274 = vunpack.c.h.b16 %v109
    %v275 = vunpack.c.l.b16 %v110
    %v276 = vunpack.c.h.b16 %v110
    %v277 = vunpack.c.l.b16 %v111
    %v278 = vunpack.c.h.b16 %v111
    %v279 = vunpack.c.l.b16 %v112
    %v280 = vunpack.c.h.b16 %v112
    %v281 = vunpack.c.l.b16 %v113
    %v282 = vunpack.c.h.b16 %v113
    %v283 = vunpack.c.l.b16 %v114
    %v284 = vunpack.c.h.b16 %v114
    %v285 = vunpack.c.l.b16 %v115
    %v286 = vunpack.c.h.b16 %v115
    %v287 = vunpack.c.l.b16 %v116
    %v288 = vunpack.c.h.b16 %v116
    %v289 = vunpack.c.l.b16 %v117
    %v290 = vunpack.c.h.b16 %v117
    %v291 = vunpack.c.l.b16 %v118
    %v292 = vunpack.c.h.b16 %v118
    %v293 = vunpack.c.l.b16 %v119
    %v294 = vunpack.c.h.b16 %v119
    %v295 = vunpack.c.l.b16 %v120
    %v296 = vunpack.c.h.b16 %v120
    %v297 = vunpack.c.l.b16 %v121
    %v298 = vunpack.c.h.b16 %v121
    %v299 = vunpack.c.l.b16 %v122
    %v300 = vunpack.c.h.b16 %v122
    %v301 = vunpack.c.l.b16 %v123
    %v302 = vunpack.c.h.b16 %v123
    %v303 = vunpack.c.l.b16 %v124
    %v304 = vunpack.c.h.b16 %v124
    %v305 = vunpack.c.l.b16 %v125
    %v306 = vunpack.c.h.b16 %v125
    %v307 = vunpack.c.l.b16 %v126
    %v308 = vunpack.c.h.b16 %v126
    %v309 = vunpack.c.l.b16 %v127
    %v310 = vunpack.c.h.b16 %v127
    %v311 = vunpack.c.l.b16 %v128
    %v312 = vunpack.c.h.b16 %v128
    %v313 = vunpack.c.l.b16 %v129
    %v314 = vunpack.c.h.b16 %v129
    %v315 = vunpack.c.l.b16 %v130
    %v316 = vunpack.c.h.b16 %v130
    %v317 = vunpack.c.l.b16 %v131
    %v318 = vunpack.c.h.b16 %v131
    %v319 = vunpack.c.l.b16 %v132
    %v320 = vunpack.c.h.b16 %v132
    %v321 = vunpack.c.l.b16 %v133
    %v322 = vunpack.c.h.b16 %v133
    %v323 = vunpack.c.l.b16 %v134
    %v324 = vunpack.c.h.b16 %v134
    %v325 = vunpack.c.l.b16 %v135
    %v326 = vunpack.c.h.b16 %v135
    %v327 = vunpack.c.l.b16 %v136
    %v328 = vunpack.c.h.b16 %v136
    %v329 = vunpack.c.l.b16 %v137
    %v330 = vunpack.c.h.b16 %v137
    %v331 = vunpack.c.l.b16 %v138
    %v332 = vunpack.c.h.b16 %v138
    %v333 = vunpack.c.l.b16 %v139
    %v334 = vunpack.c.h.b16 %v139
    %v335 = vunpack.c.l.b16 %v140
    %v336 = vunpack.c.h.b16 %v140
    %v337 = vunpack.c.l.b16 %v141
    %v338 = vunpack.c.h.b16 %v141
    %v339 = vunpack.c.l.b16 %v142
    %v340 = vunpack.c.h.b16 %v142
    %v341 = vunpack.c.l.b16 %v143
    %v342 = vunpack.c.h.b16 %v143
    %v343 = vunpack.c.l.b16 %v144
    %v344 = vunpack.c.h.b16 %v144
    %v345 = vunpack.c.l.b16 %v145
    %v346 = vunpack.c.h.b16 %v145
    %v347 = vunpack.c.l.b16 %v146
    %v348 = vunpack.c.h.b16 %v146
    %v349 = vunpack.c.l.b16 %v147
    %v350 = vunpack.c.h.b16 %v147
    %v351 = vunpack.c.l.b16 %v148
    %v352 = vunpack.c.h.b16 %v148
    %v353 = vunpack.c.l.b16 %v149
    %v354 = vunpack.c.h.b16 %v149
    %v355 = vunpack.c.l.b16 %v150
    %v356 = vunpack.c.h.b16 %v150
    %v357 = vunpack.c.l.b16 %v151
    %v358 = vunpack.c.h.b16 %v151
    %v359 = vunpack.c.l.b16 %v152
    %v360 = vunpack.c.h.b16 %v152
    %v361 = vunpack.c.l.b16 %v153
    %v362 = vunpack.c.h.b16 %v153
    %v363 = vunpack.c.l.b16 %v154
    %v364 = vunpack.c.h.b16 %v154
    %v365 = vunpack.c.l.b16 %v155
    %v366 = vunpack.c.h.b16 %v155
    %v367 = vunpack.c.l.b16 %v156
    %v368 = vunpack.c.h.b16 %v156
    %v369 = vunpack.c.l.b16 %v157
    %v370 = vunpack.c.h.b16 %v157
    %v371 = vunpack.c.l.b16 %v158
    %v372 = vunpack.c.h.b16 %v158
    %v373 = vpack.c.b16 %v249, %v245
    %v374 = vpack.c.b16 %v250, %v246
    %v375 = vpack.c.b16 %v251, %v247
    %v376 = vpack.c.b16 %v252, %v248
    %v377 = vpack.c.b16 %v257, %v253
    %v378 = vpack.c.b16 %v258, %v254
    %v379 = vpack.c.b16 %v259, %v255
    %v380 = vpack.c.b16 %v260, %v256
    %v381 = vpack.c.b16 %v265, %v261
    %v382 = vpack.c.b16 %v266, %v262
    %v383 = vpack.c.b16 %v267, %v263
    %v384 = vpack.c.b16 %v268, %v264
    %v385 = vpack.c.b16 %v273, %v269
    %v386 = vpack.c.b16 %v274, %v270
    %v387 = vpack.c.b16 %v275, %v271
    %v388 = vpack.c.b16 %v276, %v272
    %v389 = vpack.c.b16 %v281, %v277
    %v390 = vpack.c.b16 %v282, %v278
    %v391 = vpack.c.b16 %v283, %v279
    %v392 = vpack.c.b16 %v284, %v280
    %v393 = vpack.c.b16 %v289, %v285
    %v394 = vpack.c.b16 %v290, %v286
    %v395 = vpack.c.b16 %v291, %v287
    %v396 = vpack.c.b16 %v292, %v288
    %v397 = vpack.c.b16 %v297, %v293
    %v398 = vpack.c.b16 %v298, %v294
    %v399 = vpack.c.b16 %v299, %v295
    %v400 = vpack.c.b16 %v300, %v296
    %v401 = vpack.c.b16 %v305, %v301
    %v402 = vpack.c.b16 %v306, %v302
    %v403 = vpack.c.b16 %v307, %v303
    %v404 = vpack.c.b16 %v308, %v304
    %v405 = vpack.c.b16 %v313, %v309
    %v406 = vpack.c.b16 %v314, %v310
    %v407 = vpack.c.b16 %v315, %v311
    %v408 = vpack.c.b16 %v316, %v312
    %v409 = vpack.c.b16 %v321, %v317
    %v410 = vpack.c.b16 %v322, %v318
    %v411 = vpack.c.b16 %v323, %v319
    %v412 = vpack.c.b16 %v324, %v320
    %v413 = vpack.c.b16 %v329, %v325
    %v414 = vpack.c.b16 %v330, %v326
    %v415 = vpack.c.b16 %v331, %v327
    %v416 = vpack.c.b16 %v332, %v328
    %v417 = vpack.c.b16 %v337, %v333
    %v418 = vpack.c.b16 %v338, %v334
    %v419 = vpack.c.b16 %v339, %v335
    %v420 = vpack.c.b16 %v340, %v336
    %v421 = vpack.c.b16 %v345, %v341
    %v422 = vpack.c.b16 %v346, %v342
    %v423 = vpack.c.b16 %v347, %v343
    %v424 = vpack.c.b16 %v348, %v344
    %v425 = vpack.c.b16 %v353, %v349
    %v426 = vpack.c.b16 %v354, %v350
    %v427 = vpack.c.b16 %v355, %v351
    %v428 = vpack.c.b16 %v356, %v352
    %v429 = vpack.c.b16 %v361, %v357
    %v430 = vpack.c.b16 %v362, %v358
    %v431 = vpack.c.b16 %v363, %v359
    %v432 = vpack.c.b16 %v364, %v360
    %v433 = vpack.c.b16 %v369, %v365
    %v434 = vpack.c.b16 %v370, %v366
    %v435 = vpack.c.b16 %v371, %v367
    %v436 = vpack.c.b16 %v372, %v368
    %501 = vmatprep.subr.bf16.mxu0 %v402
    %502 = vmatpush1.bf16.msra.mxu0 %v401
    %503 = vmatprep.subr.bf16.mxu0 %v398
    %504 = vmatpush1.bf16.msra.mxu0 %v397
    %505 = vmatprep.subr.bf16.mxu0 %v394
    %506 = vmatpush1.bf16.msra.mxu0 %v393
    %507 = vmatprep.subr.bf16.mxu0 %v390
    %508 = vmatpush1.bf16.msra.mxu0 %v389
    %509 = vmatprep.subr.bf16.mxu0 %v386
    %510 = vmatpush1.bf16.msra.mxu0 %v385
    %511 = vmatprep.subr.bf16.mxu0 %v382
    %512 = vmatpush1.bf16.msra.mxu0 %v381
    %513 = vmatprep.subr.bf16.mxu0 %v378
    %514 = vmatpush1.bf16.msra.mxu0 %v377
    %515 = vmatprep.subr.bf16.mxu0 %v374
    %516 = vmatpush1.bf16.msra.mxu0 %v373
    %517 = vmatprep.subr.bf16.mxu0 %v434
    %518 = vmatpush2.bf16.msra.mxu0 %v433
    %519 = vmatprep.subr.bf16.mxu0 %v430
    %520 = vmatpush2.bf16.msra.mxu0 %v429
    %521 = vmatprep.subr.bf16.mxu0 %v426
    %522 = vmatpush2.bf16.msra.mxu0 %v425
    %523 = vmatprep.subr.bf16.mxu0 %v422
    %524 = vmatpush2.bf16.msra.mxu0 %v421
    %525 = vmatprep.subr.bf16.mxu0 %v418
    %526 = vmatpush2.bf16.msra.mxu0 %v417
    %527 = vmatprep.subr.bf16.mxu0 %v414
    %528 = vmatpush2.bf16.msra.mxu0 %v413
    %529 = vmatprep.subr.bf16.mxu0 %v410
    %530 = vmatpush2.bf16.msra.mxu0 %v409
    %531 = vmatprep.subr.bf16.mxu0 %v406
    %532 = vmatpush2.bf16.msra.mxu0 %v405
    %533 = vmatprep.mubr.bf16.mxu0 %v94
    %534 = vmatmul.mubr.bf16.gmra.mxu0 %v93
    %v535 = vpop.f32.mrf.mxu0
    %v536 = vadd.f32 %v164, %v535
    %v537 = vpop.f32.mrf.mxu0
    %v538 = vadd.f32 %v168, %v537
    %v539 = vpop.f32.mrf.mxu0
    %v540 = vpop.f32.mrf.mxu0
    %541 = vdwg.mxu0
    %542 = vmatprep.subr.bf16.mxu0 %v404
    %543 = vmatpush1.bf16.msra.mxu0 %v403
    %544 = vmatprep.subr.bf16.mxu0 %v400
    %545 = vmatpush1.bf16.msra.mxu0 %v399
    %546 = vmatprep.subr.bf16.mxu0 %v396
    %547 = vmatpush1.bf16.msra.mxu0 %v395
    %548 = vmatprep.subr.bf16.mxu0 %v392
    %549 = vmatpush1.bf16.msra.mxu0 %v391
    %550 = vmatprep.subr.bf16.mxu0 %v388
    %551 = vmatpush1.bf16.msra.mxu0 %v387
    %552 = vmatprep.subr.bf16.mxu0 %v384
    %553 = vmatpush1.bf16.msra.mxu0 %v383
    %554 = vmatprep.subr.bf16.mxu0 %v380
    %555 = vmatpush1.bf16.msra.mxu0 %v379
    %556 = vmatprep.subr.bf16.mxu0 %v376
    %557 = vmatpush1.bf16.msra.mxu0 %v375
    %558 = vmatprep.subr.bf16.mxu0 %v436
    %559 = vmatpush2.bf16.msra.mxu0 %v435
    %560 = vmatprep.subr.bf16.mxu0 %v432
    %561 = vmatpush2.bf16.msra.mxu0 %v431
    %562 = vmatprep.subr.bf16.mxu0 %v428
    %563 = vmatpush2.bf16.msra.mxu0 %v427
    %564 = vmatprep.subr.bf16.mxu0 %v424
    %565 = vmatpush2.bf16.msra.mxu0 %v423
    %566 = vmatprep.subr.bf16.mxu0 %v420
    %567 = vmatpush2.bf16.msra.mxu0 %v419
    %568 = vmatprep.subr.bf16.mxu0 %v416
    %569 = vmatpush2.bf16.msra.mxu0 %v415
    %570 = vmatprep.subr.bf16.mxu0 %v412
    %571 = vmatpush2.bf16.msra.mxu0 %v411
    %572 = vmatprep.subr.bf16.mxu0 %v408
    %573 = vmatpush2.bf16.msra.mxu0 %v407
    %574 = vmatprep.mubr.bf16.mxu0 %v94
    %575 = vmatmul.mubr.bf16.gmra.mxu0 %v93
    %v576 = vpop.f32.mrf.mxu0
    %v577 = vadd.f32 %v172, %v576
    %v578 = vpop.f32.mrf.mxu0
    %v579 = vadd.f32 %v176, %v578
    %v580 = vpop.f32.mrf.mxu0
    %v581 = vpop.f32.mrf.mxu0
    %582 = vdwg.mxu0
    %vm583 = vcmp.gt.f32.partialorder %v536, 0.0
    %vm584 = vcmp.gt.f32.partialorder %v538, 0.0
    %vm585 = vcmp.gt.f32.partialorder %v577, 0.0
    %vm586 = vcmp.gt.f32.partialorder %v579, 0.0
    %v587 = vmul.f32 %v536, 0.1
    %v588 = vmul.f32 %v538, 0.1
    %v589 = vmul.f32 %v577, 0.1
    %v590 = vmul.f32 %v579, 0.1
    %v591 = vsel %vm583, %v536, %v587
    %v592 = vsel %vm584, %v538, %v588
    %v593 = vsel %vm585, %v577, %v589
    %v594 = vsel %vm586, %v579, %v590
    %v595 = vpack.c.bf16 %v591, %v591
    %v596 = vpack.c.bf16 %v592, %v592
    %v597 = vpack.c.bf16 %v593, %v593
    %v598 = vpack.c.bf16 %v594, %v594
    %v599 = vld [vmem:[#allocation8] sm:$0xff]
    %v600 = vld [vmem:[#allocation8 + $0x8] sm:$0xff]
    %v601 = vld [vmem:[#allocation8 + $0x10] sm:$0xff]
    %v602 = vld [vmem:[#allocation8 + $0x18] sm:$0xff]
    %v603 = vld [vmem:[#allocation8 + $0x20] sm:$0xff]
    %v604 = vld [vmem:[#allocation8 + $0x28] sm:$0xff]
    %v605 = vld [vmem:[#allocation8 + $0x30] sm:$0xff]
    %v606 = vld [vmem:[#allocation8 + $0x38] sm:$0xff]
    %v607 = vld [vmem:[#allocation8 + $0x40] sm:$0xff]
    %v608 = vld [vmem:[#allocation8 + $0x48] sm:$0xff]
    %v609 = vld [vmem:[#allocation8 + $0x50] sm:$0xff]
    %v610 = vld [vmem:[#allocation8 + $0x58] sm:$0xff]
    %v611 = vld [vmem:[#allocation8 + $0x60] sm:$0xff]
    %v612 = vld [vmem:[#allocation8 + $0x68] sm:$0xff]
    %v613 = vld [vmem:[#allocation8 + $0x70] sm:$0xff]
    %v614 = vld [vmem:[#allocation8 + $0x78] sm:$0xff]
    %v615 = vld [vmem:[#allocation8 + $0x80] sm:$0xff]
    %v616 = vld [vmem:[#allocation8 + $0x88] sm:$0xff]
    %v617 = vld [vmem:[#allocation8 + $0x90] sm:$0xff]
    %v618 = vld [vmem:[#allocation8 + $0x98] sm:$0xff]
    %v619 = vld [vmem:[#allocation8 + $0xa0] sm:$0xff]
    %v620 = vld [vmem:[#allocation8 + $0xa8] sm:$0xff]
    %v621 = vld [vmem:[#allocation8 + $0xb0] sm:$0xff]
    %v622 = vld [vmem:[#allocation8 + $0xb8] sm:$0xff]
    %v623 = vld [vmem:[#allocation8 + $0xc0] sm:$0xff]
    %v624 = vld [vmem:[#allocation8 + $0xc8] sm:$0xff]
    %v625 = vld [vmem:[#allocation8 + $0xd0] sm:$0xff]
    %v626 = vld [vmem:[#allocation8 + $0xd8] sm:$0xff]
    %v627 = vld [vmem:[#allocation8 + $0xe0] sm:$0xff]
    %v628 = vld [vmem:[#allocation8 + $0xe8] sm:$0xff]
    %v629 = vld [vmem:[#allocation8 + $0xf0] sm:$0xff]
    %v630 = vld [vmem:[#allocation8 + $0xf8] sm:$0xff]
    %v631 = vld [vmem:[#allocation8 + $0x100] sm:$0xff]
    %v632 = vld [vmem:[#allocation8 + $0x108] sm:$0xff]
    %v633 = vld [vmem:[#allocation8 + $0x110] sm:$0xff]
    %v634 = vld [vmem:[#allocation8 + $0x118] sm:$0xff]
    %v635 = vld [vmem:[#allocation8 + $0x120] sm:$0xff]
    %v636 = vld [vmem:[#allocation8 + $0x128] sm:$0xff]
    %v637 = vld [vmem:[#allocation8 + $0x130] sm:$0xff]
    %v638 = vld [vmem:[#allocation8 + $0x138] sm:$0xff]
    %v639 = vld [vmem:[#allocation8 + $0x140] sm:$0xff]
    %v640 = vld [vmem:[#allocation8 + $0x148] sm:$0xff]
    %v641 = vld [vmem:[#allocation8 + $0x150] sm:$0xff]
    %v642 = vld [vmem:[#allocation8 + $0x158] sm:$0xff]
    %v643 = vld [vmem:[#allocation8 + $0x160] sm:$0xff]
    %v644 = vld [vmem:[#allocation8 + $0x168] sm:$0xff]
    %v645 = vld [vmem:[#allocation8 + $0x170] sm:$0xff]
    %v646 = vld [vmem:[#allocation8 + $0x178] sm:$0xff]
    %v647 = vld [vmem:[#allocation8 + $0x180] sm:$0xff]
    %v648 = vld [vmem:[#allocation8 + $0x188] sm:$0xff]
    %v649 = vld [vmem:[#allocation8 + $0x190] sm:$0xff]
    %v650 = vld [vmem:[#allocation8 + $0x198] sm:$0xff]
    %v651 = vld [vmem:[#allocation8 + $0x1a0] sm:$0xff]
    %v652 = vld [vmem:[#allocation8 + $0x1a8] sm:$0xff]
    %v653 = vld [vmem:[#allocation8 + $0x1b0] sm:$0xff]
    %v654 = vld [vmem:[#allocation8 + $0x1b8] sm:$0xff]
    %v655 = vld [vmem:[#allocation8 + $0x1c0] sm:$0xff]
    %v656 = vld [vmem:[#allocation8 + $0x1c8] sm:$0xff]
    %v657 = vld [vmem:[#allocation8 + $0x1d0] sm:$0xff]
    %v658 = vld [vmem:[#allocation8 + $0x1d8] sm:$0xff]
    %v659 = vld [vmem:[#allocation8 + $0x1e0] sm:$0xff]
    %v660 = vld [vmem:[#allocation8 + $0x1e8] sm:$0xff]
    %v661 = vld [vmem:[#allocation8 + $0x1f0] sm:$0xff]
    %v662 = vld [vmem:[#allocation8 + $0x1f8] sm:$0xff]
    %v663 = vld [vmem:[#allocation8 + $0x200] sm:$0xff]
    %v664 = vld [vmem:[#allocation8 + $0x208] sm:$0xff]
    %v665 = vld [vmem:[#allocation8 + $0x210] sm:$0xff]
    %v666 = vld [vmem:[#allocation8 + $0x218] sm:$0xff]
    %v667 = vld [vmem:[#allocation8 + $0x220] sm:$0xff]
    %v668 = vld [vmem:[#allocation8 + $0x228] sm:$0xff]
    %v669 = vld [vmem:[#allocation8 + $0x230] sm:$0xff]
    %v670 = vld [vmem:[#allocation8 + $0x238] sm:$0xff]
    %v671 = vld [vmem:[#allocation8 + $0x240] sm:$0xff]
    %v672 = vld [vmem:[#allocation8 + $0x248] sm:$0xff]
    %v673 = vld [vmem:[#allocation8 + $0x250] sm:$0xff]
    %v674 = vld [vmem:[#allocation8 + $0x258] sm:$0xff]
    %v675 = vld [vmem:[#allocation8 + $0x260] sm:$0xff]
    %v676 = vld [vmem:[#allocation8 + $0x268] sm:$0xff]
    %v677 = vld [vmem:[#allocation8 + $0x270] sm:$0xff]
    %v678 = vld [vmem:[#allocation8 + $0x278] sm:$0xff]
    %v679 = vld [vmem:[#allocation8 + $0x280] sm:$0xff]
    %v680 = vld [vmem:[#allocation8 + $0x288] sm:$0xff]
    %v681 = vld [vmem:[#allocation8 + $0x290] sm:$0xff]
    %v682 = vld [vmem:[#allocation8 + $0x298] sm:$0xff]
    %v683 = vld [vmem:[#allocation8 + $0x2a0] sm:$0xff]
    %v684 = vld [vmem:[#allocation8 + $0x2a8] sm:$0xff]
    %v685 = vld [vmem:[#allocation8 + $0x2b0] sm:$0xff]
    %v686 = vld [vmem:[#allocation8 + $0x2b8] sm:$0xff]
    %v687 = vld [vmem:[#allocation8 + $0x2c0] sm:$0xff]
    %v688 = vld [vmem:[#allocation8 + $0x2c8] sm:$0xff]
    %v689 = vld [vmem:[#allocation8 + $0x2d0] sm:$0xff]
    %v690 = vld [vmem:[#allocation8 + $0x2d8] sm:$0xff]
    %v691 = vld [vmem:[#allocation8 + $0x2e0] sm:$0xff]
    %v692 = vld [vmem:[#allocation8 + $0x2e8] sm:$0xff]
    %v693 = vld [vmem:[#allocation8 + $0x2f0] sm:$0xff]
    %v694 = vld [vmem:[#allocation8 + $0x2f8] sm:$0xff]
    %v695 = vld [vmem:[#allocation8 + $0x300] sm:$0xff]
    %v696 = vld [vmem:[#allocation8 + $0x308] sm:$0xff]
    %v697 = vld [vmem:[#allocation8 + $0x310] sm:$0xff]
    %v698 = vld [vmem:[#allocation8 + $0x318] sm:$0xff]
    %v699 = vld [vmem:[#allocation8 + $0x320] sm:$0xff]
    %v700 = vld [vmem:[#allocation8 + $0x328] sm:$0xff]
    %v701 = vld [vmem:[#allocation8 + $0x330] sm:$0xff]
    %v702 = vld [vmem:[#allocation8 + $0x338] sm:$0xff]
    %v703 = vld [vmem:[#allocation8 + $0x340] sm:$0xff]
    %v704 = vld [vmem:[#allocation8 + $0x348] sm:$0xff]
    %v705 = vld [vmem:[#allocation8 + $0x350] sm:$0xff]
    %v706 = vld [vmem:[#allocation8 + $0x358] sm:$0xff]
    %v707 = vld [vmem:[#allocation8 + $0x360] sm:$0xff]
    %v708 = vld [vmem:[#allocation8 + $0x368] sm:$0xff]
    %v709 = vld [vmem:[#allocation8 + $0x370] sm:$0xff]
    %v710 = vld [vmem:[#allocation8 + $0x378] sm:$0xff]
    %v711 = vld [vmem:[#allocation8 + $0x380] sm:$0xff]
    %v712 = vld [vmem:[#allocation8 + $0x388] sm:$0xff]
    %v713 = vld [vmem:[#allocation8 + $0x390] sm:$0xff]
    %v714 = vld [vmem:[#allocation8 + $0x398] sm:$0xff]
    %v715 = vld [vmem:[#allocation8 + $0x3a0] sm:$0xff]
    %v716 = vld [vmem:[#allocation8 + $0x3a8] sm:$0xff]
    %v717 = vld [vmem:[#allocation8 + $0x3b0] sm:$0xff]
    %v718 = vld [vmem:[#allocation8 + $0x3b8] sm:$0xff]
    %v719 = vld [vmem:[#allocation8 + $0x3c0] sm:$0xff]
    %v720 = vld [vmem:[#allocation8 + $0x3c8] sm:$0xff]
    %v721 = vld [vmem:[#allocation8 + $0x3d0] sm:$0xff]
    %v722 = vld [vmem:[#allocation8 + $0x3d8] sm:$0xff]
    %v723 = vld [vmem:[#allocation8 + $0x3e0] sm:$0xff]
    %v724 = vld [vmem:[#allocation8 + $0x3e8] sm:$0xff]
    %v725 = vld [vmem:[#allocation8 + $0x3f0] sm:$0xff]
    %v726 = vld [vmem:[#allocation8 + $0x3f8] sm:$0xff]
    %v727 = vld [vmem:[%s4] sm:$0xf]
    %v729 = vlaneseq
    %v730 = vshrl.u32 %v729, 7
    %v731 = vsub.s32 0, %v730
    %v732 = vrot.slane %v727, %v731
    %v733 = vlaneseq
    %v734 = vshrl.u32 %v733, 7
    %v735 = vsub.s32 1, %v734
    %v736 = vrot.slane %v727, %v735
    %v737 = vlaneseq
    %v738 = vshrl.u32 %v737, 7
    %v739 = vsub.s32 2, %v738
    %v740 = vrot.slane %v727, %v739
    %v741 = vlaneseq
    %v742 = vshrl.u32 %v741, 7
    %v743 = vsub.s32 3, %v742
    %v744 = vrot.slane %v727, %v743
    %v877 = vunpack.c.l.b16 %v599
    %v878 = vunpack.c.h.b16 %v599
    %v879 = vunpack.c.l.b16 %v600
    %v880 = vunpack.c.h.b16 %v600
    %v881 = vunpack.c.l.b16 %v601
    %v882 = vunpack.c.h.b16 %v601
    %v883 = vunpack.c.l.b16 %v602
    %v884 = vunpack.c.h.b16 %v602
    %v885 = vunpack.c.l.b16 %v603
    %v886 = vunpack.c.h.b16 %v603
    %v887 = vunpack.c.l.b16 %v604
    %v888 = vunpack.c.h.b16 %v604
    %v889 = vunpack.c.l.b16 %v605
    %v890 = vunpack.c.h.b16 %v605
    %v891 = vunpack.c.l.b16 %v606
    %v892 = vunpack.c.h.b16 %v606
    %v893 = vunpack.c.l.b16 %v607
    %v894 = vunpack.c.h.b16 %v607
    %v895 = vunpack.c.l.b16 %v608
    %v896 = vunpack.c.h.b16 %v608
    %v897 = vunpack.c.l.b16 %v609
    %v898 = vunpack.c.h.b16 %v609
    %v899 = vunpack.c.l.b16 %v610
    %v900 = vunpack.c.h.b16 %v610
    %v901 = vunpack.c.l.b16 %v611
    %v902 = vunpack.c.h.b16 %v611
    %v903 = vunpack.c.l.b16 %v612
    %v904 = vunpack.c.h.b16 %v612
    %v905 = vunpack.c.l.b16 %v613
    %v906 = vunpack.c.h.b16 %v613
    %v907 = vunpack.c.l.b16 %v614
    %v908 = vunpack.c.h.b16 %v614
    %v909 = vunpack.c.l.b16 %v615
    %v910 = vunpack.c.h.b16 %v615
    %v911 = vunpack.c.l.b16 %v616
    %v912 = vunpack.c.h.b16 %v616
    %v913 = vunpack.c.l.b16 %v617
    %v914 = vunpack.c.h.b16 %v617
    %v915 = vunpack.c.l.b16 %v618
    %v916 = vunpack.c.h.b16 %v618
    %v917 = vunpack.c.l.b16 %v619
    %v918 = vunpack.c.h.b16 %v619
    %v919 = vunpack.c.l.b16 %v620
    %v920 = vunpack.c.h.b16 %v620
    %v921 = vunpack.c.l.b16 %v621
    %v922 = vunpack.c.h.b16 %v621
    %v923 = vunpack.c.l.b16 %v622
    %v924 = vunpack.c.h.b16 %v622
    %v925 = vunpack.c.l.b16 %v623
    %v926 = vunpack.c.h.b16 %v623
    %v927 = vunpack.c.l.b16 %v624
    %v928 = vunpack.c.h.b16 %v624
    %v929 = vunpack.c.l.b16 %v625
    %v930 = vunpack.c.h.b16 %v625
    %v931 = vunpack.c.l.b16 %v626
    %v932 = vunpack.c.h.b16 %v626
    %v933 = vunpack.c.l.b16 %v627
    %v934 = vunpack.c.h.b16 %v627
    %v935 = vunpack.c.l.b16 %v628
    %v936 = vunpack.c.h.b16 %v628
    %v937 = vunpack.c.l.b16 %v629
    %v938 = vunpack.c.h.b16 %v629
    %v939 = vunpack.c.l.b16 %v630
    %v940 = vunpack.c.h.b16 %v630
    %v941 = vunpack.c.l.b16 %v631
    %v942 = vunpack.c.h.b16 %v631
    %v943 = vunpack.c.l.b16 %v632
    %v944 = vunpack.c.h.b16 %v632
    %v945 = vunpack.c.l.b16 %v633
    %v946 = vunpack.c.h.b16 %v633
    %v947 = vunpack.c.l.b16 %v634
    %v948 = vunpack.c.h.b16 %v634
    %v949 = vunpack.c.l.b16 %v635
    %v950 = vunpack.c.h.b16 %v635
    %v951 = vunpack.c.l.b16 %v636
    %v952 = vunpack.c.h.b16 %v636
    %v953 = vunpack.c.l.b16 %v637
    %v954 = vunpack.c.h.b16 %v637
    %v955 = vunpack.c.l.b16 %v638
    %v956 = vunpack.c.h.b16 %v638
    %v957 = vunpack.c.l.b16 %v639
    %v958 = vunpack.c.h.b16 %v639
    %v959 = vunpack.c.l.b16 %v640
    %v960 = vunpack.c.h.b16 %v640
    %v961 = vunpack.c.l.b16 %v641
    %v962 = vunpack.c.h.b16 %v641
    %v963 = vunpack.c.l.b16 %v642
    %v964 = vunpack.c.h.b16 %v642
    %v965 = vunpack.c.l.b16 %v643
    %v966 = vunpack.c.h.b16 %v643
    %v967 = vunpack.c.l.b16 %v644
    %v968 = vunpack.c.h.b16 %v644
    %v969 = vunpack.c.l.b16 %v645
    %v970 = vunpack.c.h.b16 %v645
    %v971 = vunpack.c.l.b16 %v646
    %v972 = vunpack.c.h.b16 %v646
    %v973 = vunpack.c.l.b16 %v647
    %v974 = vunpack.c.h.b16 %v647
    %v975 = vunpack.c.l.b16 %v648
    %v976 = vunpack.c.h.b16 %v648
    %v977 = vunpack.c.l.b16 %v649
    %v978 = vunpack.c.h.b16 %v649
    %v979 = vunpack.c.l.b16 %v650
    %v980 = vunpack.c.h.b16 %v650
    %v981 = vunpack.c.l.b16 %v651
    %v982 = vunpack.c.h.b16 %v651
    %v983 = vunpack.c.l.b16 %v652
    %v984 = vunpack.c.h.b16 %v652
    %v985 = vunpack.c.l.b16 %v653
    %v986 = vunpack.c.h.b16 %v653
    %v987 = vunpack.c.l.b16 %v654
    %v988 = vunpack.c.h.b16 %v654
    %v989 = vunpack.c.l.b16 %v655
    %v990 = vunpack.c.h.b16 %v655
    %v991 = vunpack.c.l.b16 %v656
    %v992 = vunpack.c.h.b16 %v656
    %v993 = vunpack.c.l.b16 %v657
    %v994 = vunpack.c.h.b16 %v657
    %v995 = vunpack.c.l.b16 %v658
    %v996 = vunpack.c.h.b16 %v658
    %v997 = vunpack.c.l.b16 %v659
    %v998 = vunpack.c.h.b16 %v659
    %v999 = vunpack.c.l.b16 %v660
    %v1000 = vunpack.c.h.b16 %v660
    %v1001 = vunpack.c.l.b16 %v661
    %v1002 = vunpack.c.h.b16 %v661
    %v1003 = vunpack.c.l.b16 %v662
    %v1004 = vunpack.c.h.b16 %v662
    %v1005 = vunpack.c.l.b16 %v663
    %v1006 = vunpack.c.h.b16 %v663
    %v1007 = vunpack.c.l.b16 %v664
    %v1008 = vunpack.c.h.b16 %v664
    %v1009 = vunpack.c.l.b16 %v665
    %v1010 = vunpack.c.h.b16 %v665
    %v1011 = vunpack.c.l.b16 %v666
    %v1012 = vunpack.c.h.b16 %v666
    %v1013 = vunpack.c.l.b16 %v667
    %v1014 = vunpack.c.h.b16 %v667
    %v1015 = vunpack.c.l.b16 %v668
    %v1016 = vunpack.c.h.b16 %v668
    %v1017 = vunpack.c.l.b16 %v669
    %v1018 = vunpack.c.h.b16 %v669
    %v1019 = vunpack.c.l.b16 %v670
    %v1020 = vunpack.c.h.b16 %v670
    %v1021 = vunpack.c.l.b16 %v671
    %v1022 = vunpack.c.h.b16 %v671
    %v1023 = vunpack.c.l.b16 %v672
    %v1024 = vunpack.c.h.b16 %v672
    %v1025 = vunpack.c.l.b16 %v673
    %v1026 = vunpack.c.h.b16 %v673
    %v1027 = vunpack.c.l.b16 %v674
    %v1028 = vunpack.c.h.b16 %v674
    %v1029 = vunpack.c.l.b16 %v675
    %v1030 = vunpack.c.h.b16 %v675
    %v1031 = vunpack.c.l.b16 %v676
    %v1032 = vunpack.c.h.b16 %v676
    %v1033 = vunpack.c.l.b16 %v677
    %v1034 = vunpack.c.h.b16 %v677
    %v1035 = vunpack.c.l.b16 %v678
    %v1036 = vunpack.c.h.b16 %v678
    %v1037 = vunpack.c.l.b16 %v679
    %v1038 = vunpack.c.h.b16 %v679
    %v1039 = vunpack.c.l.b16 %v680
    %v1040 = vunpack.c.h.b16 %v680
    %v1041 = vunpack.c.l.b16 %v681
    %v1042 = vunpack.c.h.b16 %v681
    %v1043 = vunpack.c.l.b16 %v682
    %v1044 = vunpack.c.h.b16 %v682
    %v1045 = vunpack.c.l.b16 %v683
    %v1046 = vunpack.c.h.b16 %v683
    %v1047 = vunpack.c.l.b16 %v684
    %v1048 = vunpack.c.h.b16 %v684
    %v1049 = vunpack.c.l.b16 %v685
    %v1050 = vunpack.c.h.b16 %v685
    %v1051 = vunpack.c.l.b16 %v686
    %v1052 = vunpack.c.h.b16 %v686
    %v1053 = vunpack.c.l.b16 %v687
    %v1054 = vunpack.c.h.b16 %v687
    %v1055 = vunpack.c.l.b16 %v688
    %v1056 = vunpack.c.h.b16 %v688
    %v1057 = vunpack.c.l.b16 %v689
    %v1058 = vunpack.c.h.b16 %v689
    %v1059 = vunpack.c.l.b16 %v690
    %v1060 = vunpack.c.h.b16 %v690
    %v1061 = vunpack.c.l.b16 %v691
    %v1062 = vunpack.c.h.b16 %v691
    %v1063 = vunpack.c.l.b16 %v692
    %v1064 = vunpack.c.h.b16 %v692
    %v1065 = vunpack.c.l.b16 %v693
    %v1066 = vunpack.c.h.b16 %v693
    %v1067 = vunpack.c.l.b16 %v694
    %v1068 = vunpack.c.h.b16 %v694
    %v1069 = vunpack.c.l.b16 %v695
    %v1070 = vunpack.c.h.b16 %v695
    %v1071 = vunpack.c.l.b16 %v696
    %v1072 = vunpack.c.h.b16 %v696
    %v1073 = vunpack.c.l.b16 %v697
    %v1074 = vunpack.c.h.b16 %v697
    %v1075 = vunpack.c.l.b16 %v698
    %v1076 = vunpack.c.h.b16 %v698
    %v1077 = vunpack.c.l.b16 %v699
    %v1078 = vunpack.c.h.b16 %v699
    %v1079 = vunpack.c.l.b16 %v700
    %v1080 = vunpack.c.h.b16 %v700
    %v1081 = vunpack.c.l.b16 %v701
    %v1082 = vunpack.c.h.b16 %v701
    %v1083 = vunpack.c.l.b16 %v702
    %v1084 = vunpack.c.h.b16 %v702
    %v1085 = vunpack.c.l.b16 %v703
    %v1086 = vunpack.c.h.b16 %v703
    %v1087 = vunpack.c.l.b16 %v704
    %v1088 = vunpack.c.h.b16 %v704
    %v1089 = vunpack.c.l.b16 %v705
    %v1090 = vunpack.c.h.b16 %v705
    %v1091 = vunpack.c.l.b16 %v706
    %v1092 = vunpack.c.h.b16 %v706
    %v1093 = vunpack.c.l.b16 %v707
    %v1094 = vunpack.c.h.b16 %v707
    %v1095 = vunpack.c.l.b16 %v708
    %v1096 = vunpack.c.h.b16 %v708
    %v1097 = vunpack.c.l.b16 %v709
    %v1098 = vunpack.c.h.b16 %v709
    %v1099 = vunpack.c.l.b16 %v710
    %v1100 = vunpack.c.h.b16 %v710
    %v1101 = vunpack.c.l.b16 %v711
    %v1102 = vunpack.c.h.b16 %v711
    %v1103 = vunpack.c.l.b16 %v712
    %v1104 = vunpack.c.h.b16 %v712
    %v1105 = vunpack.c.l.b16 %v713
    %v1106 = vunpack.c.h.b16 %v713
    %v1107 = vunpack.c.l.b16 %v714
    %v1108 = vunpack.c.h.b16 %v714
    %v1109 = vunpack.c.l.b16 %v715
    %v1110 = vunpack.c.h.b16 %v715
    %v1111 = vunpack.c.l.b16 %v716
    %v1112 = vunpack.c.h.b16 %v716
    %v1113 = vunpack.c.l.b16 %v717
    %v1114 = vunpack.c.h.b16 %v717
    %v1115 = vunpack.c.l.b16 %v718
    %v1116 = vunpack.c.h.b16 %v718
    %v1117 = vunpack.c.l.b16 %v719
    %v1118 = vunpack.c.h.b16 %v719
    %v1119 = vunpack.c.l.b16 %v720
    %v1120 = vunpack.c.h.b16 %v720
    %v1121 = vunpack.c.l.b16 %v721
    %v1122 = vunpack.c.h.b16 %v721
    %v1123 = vunpack.c.l.b16 %v722
    %v1124 = vunpack.c.h.b16 %v722
    %v1125 = vunpack.c.l.b16 %v723
    %v1126 = vunpack.c.h.b16 %v723
    %v1127 = vunpack.c.l.b16 %v724
    %v1128 = vunpack.c.h.b16 %v724
    %v1129 = vunpack.c.l.b16 %v725
    %v1130 = vunpack.c.h.b16 %v725
    %v1131 = vunpack.c.l.b16 %v726
    %v1132 = vunpack.c.h.b16 %v726
    %v1133 = vpack.c.b16 %v881, %v877
    %v1134 = vpack.c.b16 %v882, %v878
    %v1135 = vpack.c.b16 %v883, %v879
    %v1136 = vpack.c.b16 %v884, %v880
    %v1137 = vpack.c.b16 %v889, %v885
    %v1138 = vpack.c.b16 %v890, %v886
    %v1139 = vpack.c.b16 %v891, %v887
    %v1140 = vpack.c.b16 %v892, %v888
    %v1141 = vpack.c.b16 %v897, %v893
    %v1142 = vpack.c.b16 %v898, %v894
    %v1143 = vpack.c.b16 %v899, %v895
    %v1144 = vpack.c.b16 %v900, %v896
    %v1145 = vpack.c.b16 %v905, %v901
    %v1146 = vpack.c.b16 %v906, %v902
    %v1147 = vpack.c.b16 %v907, %v903
    %v1148 = vpack.c.b16 %v908, %v904
    %v1149 = vpack.c.b16 %v913, %v909
    %v1150 = vpack.c.b16 %v914, %v910
    %v1151 = vpack.c.b16 %v915, %v911
    %v1152 = vpack.c.b16 %v916, %v912
    %v1153 = vpack.c.b16 %v921, %v917
    %v1154 = vpack.c.b16 %v922, %v918
    %v1155 = vpack.c.b16 %v923, %v919
    %v1156 = vpack.c.b16 %v924, %v920
    %v1157 = vpack.c.b16 %v929, %v925
    %v1158 = vpack.c.b16 %v930, %v926
    %v1159 = vpack.c.b16 %v931, %v927
    %v1160 = vpack.c.b16 %v932, %v928
    %v1161 = vpack.c.b16 %v937, %v933
    %v1162 = vpack.c.b16 %v938, %v934
    %v1163 = vpack.c.b16 %v939, %v935
    %v1164 = vpack.c.b16 %v940, %v936
    %v1165 = vpack.c.b16 %v945, %v941
    %v1166 = vpack.c.b16 %v946, %v942
    %v1167 = vpack.c.b16 %v947, %v943
    %v1168 = vpack.c.b16 %v948, %v944
    %v1169 = vpack.c.b16 %v953, %v949
    %v1170 = vpack.c.b16 %v954, %v950
    %v1171 = vpack.c.b16 %v955, %v951
    %v1172 = vpack.c.b16 %v956, %v952
    %v1173 = vpack.c.b16 %v961, %v957
    %v1174 = vpack.c.b16 %v962, %v958
    %v1175 = vpack.c.b16 %v963, %v959
    %v1176 = vpack.c.b16 %v964, %v960
    %v1177 = vpack.c.b16 %v969, %v965
    %v1178 = vpack.c.b16 %v970, %v966
    %v1179 = vpack.c.b16 %v971, %v967
    %v1180 = vpack.c.b16 %v972, %v968
    %v1181 = vpack.c.b16 %v977, %v973
    %v1182 = vpack.c.b16 %v978, %v974
    %v1183 = vpack.c.b16 %v979, %v975
    %v1184 = vpack.c.b16 %v980, %v976
    %v1185 = vpack.c.b16 %v985, %v981
    %v1186 = vpack.c.b16 %v986, %v982
    %v1187 = vpack.c.b16 %v987, %v983
    %v1188 = vpack.c.b16 %v988, %v984
    %v1189 = vpack.c.b16 %v993, %v989
    %v1190 = vpack.c.b16 %v994, %v990
    %v1191 = vpack.c.b16 %v995, %v991
    %v1192 = vpack.c.b16 %v996, %v992
    %v1193 = vpack.c.b16 %v1001, %v997
    %v1194 = vpack.c.b16 %v1002, %v998
    %v1195 = vpack.c.b16 %v1003, %v999
    %v1196 = vpack.c.b16 %v1004, %v1000
    %v1197 = vpack.c.b16 %v1009, %v1005
    %v1198 = vpack.c.b16 %v1010, %v1006
    %v1199 = vpack.c.b16 %v1011, %v1007
    %v1200 = vpack.c.b16 %v1012, %v1008
    %v1201 = vpack.c.b16 %v1017, %v1013
    %v1202 = vpack.c.b16 %v1018, %v1014
    %v1203 = vpack.c.b16 %v1019, %v1015
    %v1204 = vpack.c.b16 %v1020, %v1016
    %v1205 = vpack.c.b16 %v1025, %v1021
    %v1206 = vpack.c.b16 %v1026, %v1022
    %v1207 = vpack.c.b16 %v1027, %v1023
    %v1208 = vpack.c.b16 %v1028, %v1024
    %v1209 = vpack.c.b16 %v1033, %v1029
    %v1210 = vpack.c.b16 %v1034, %v1030
    %v1211 = vpack.c.b16 %v1035, %v1031
    %v1212 = vpack.c.b16 %v1036, %v1032
    %v1213 = vpack.c.b16 %v1041, %v1037
    %v1214 = vpack.c.b16 %v1042, %v1038
    %v1215 = vpack.c.b16 %v1043, %v1039
    %v1216 = vpack.c.b16 %v1044, %v1040
    %v1217 = vpack.c.b16 %v1049, %v1045
    %v1218 = vpack.c.b16 %v1050, %v1046
    %v1219 = vpack.c.b16 %v1051, %v1047
    %v1220 = vpack.c.b16 %v1052, %v1048
    %v1221 = vpack.c.b16 %v1057, %v1053
    %v1222 = vpack.c.b16 %v1058, %v1054
    %v1223 = vpack.c.b16 %v1059, %v1055
    %v1224 = vpack.c.b16 %v1060, %v1056
    %v1225 = vpack.c.b16 %v1065, %v1061
    %v1226 = vpack.c.b16 %v1066, %v1062
    %v1227 = vpack.c.b16 %v1067, %v1063
    %v1228 = vpack.c.b16 %v1068, %v1064
    %v1229 = vpack.c.b16 %v1073, %v1069
    %v1230 = vpack.c.b16 %v1074, %v1070
    %v1231 = vpack.c.b16 %v1075, %v1071
    %v1232 = vpack.c.b16 %v1076, %v1072
    %v1233 = vpack.c.b16 %v1081, %v1077
    %v1234 = vpack.c.b16 %v1082, %v1078
    %v1235 = vpack.c.b16 %v1083, %v1079
    %v1236 = vpack.c.b16 %v1084, %v1080
    %v1237 = vpack.c.b16 %v1089, %v1085
    %v1238 = vpack.c.b16 %v1090, %v1086
    %v1239 = vpack.c.b16 %v1091, %v1087
    %v1240 = vpack.c.b16 %v1092, %v1088
    %v1241 = vpack.c.b16 %v1097, %v1093
    %v1242 = vpack.c.b16 %v1098, %v1094
    %v1243 = vpack.c.b16 %v1099, %v1095
    %v1244 = vpack.c.b16 %v1100, %v1096
    %v1245 = vpack.c.b16 %v1105, %v1101
    %v1246 = vpack.c.b16 %v1106, %v1102
    %v1247 = vpack.c.b16 %v1107, %v1103
    %v1248 = vpack.c.b16 %v1108, %v1104
    %v1249 = vpack.c.b16 %v1113, %v1109
    %v1250 = vpack.c.b16 %v1114, %v1110
    %v1251 = vpack.c.b16 %v1115, %v1111
    %v1252 = vpack.c.b16 %v1116, %v1112
    %v1253 = vpack.c.b16 %v1121, %v1117
    %v1254 = vpack.c.b16 %v1122, %v1118
    %v1255 = vpack.c.b16 %v1123, %v1119
    %v1256 = vpack.c.b16 %v1124, %v1120
    %v1257 = vpack.c.b16 %v1129, %v1125
    %v1258 = vpack.c.b16 %v1130, %v1126
    %v1259 = vpack.c.b16 %v1131, %v1127
    %v1260 = vpack.c.b16 %v1132, %v1128
    %1389 = vmatprep.subr.bf16.mxu0 %v1162
    %1390 = vmatpush1.bf16.msra.mxu0 %v1161
    %1391 = vmatprep.subr.bf16.mxu0 %v1158
    %1392 = vmatpush1.bf16.msra.mxu0 %v1157
    %1393 = vmatprep.subr.bf16.mxu0 %v1154
    %1394 = vmatpush1.bf16.msra.mxu0 %v1153
    %1395 = vmatprep.subr.bf16.mxu0 %v1150
    %1396 = vmatpush1.bf16.msra.mxu0 %v1149
    %1397 = vmatprep.subr.bf16.mxu0 %v1146
    %1398 = vmatpush1.bf16.msra.mxu0 %v1145
    %1399 = vmatprep.subr.bf16.mxu0 %v1142
    %1400 = vmatpush1.bf16.msra.mxu0 %v1141
    %1401 = vmatprep.subr.bf16.mxu0 %v1138
    %1402 = vmatpush1.bf16.msra.mxu0 %v1137
    %1403 = vmatprep.subr.bf16.mxu0 %v1134
    %1404 = vmatpush1.bf16.msra.mxu0 %v1133
    %1405 = vmatprep.subr.bf16.mxu0 %v1194
    %1406 = vmatpush2.bf16.msra.mxu0 %v1193
    %1407 = vmatprep.subr.bf16.mxu0 %v1190
    %1408 = vmatpush2.bf16.msra.mxu0 %v1189
    %1409 = vmatprep.subr.bf16.mxu0 %v1186
    %1410 = vmatpush2.bf16.msra.mxu0 %v1185
    %1411 = vmatprep.subr.bf16.mxu0 %v1182
    %1412 = vmatpush2.bf16.msra.mxu0 %v1181
    %1413 = vmatprep.subr.bf16.mxu0 %v1178
    %1414 = vmatpush2.bf16.msra.mxu0 %v1177
    %1415 = vmatprep.subr.bf16.mxu0 %v1174
    %1416 = vmatpush2.bf16.msra.mxu0 %v1173
    %1417 = vmatprep.subr.bf16.mxu0 %v1170
    %1418 = vmatpush2.bf16.msra.mxu0 %v1169
    %1419 = vmatprep.subr.bf16.mxu0 %v1166
    %1420 = vmatpush2.bf16.msra.mxu0 %v1165
    %1421 = vmatprep.mubr.bf16.mxu0 %v596
    %1422 = vmatmul.mubr.bf16.gmra.mxu0 %v595
    %v1423 = vpop.f32.mrf.mxu0
    %v1424 = vadd.f32 %v732, %v1423
    %v1425 = vpop.f32.mrf.mxu0
    %v1426 = vadd.f32 %v736, %v1425
    %v1427 = vpop.f32.mrf.mxu0
    %v1428 = vpop.f32.mrf.mxu0
    %1429 = vdwg.mxu0
    %1430 = vmatprep.subr.bf16.mxu0 %v1226
    %1431 = vmatpush1.bf16.msra.mxu0 %v1225
    %1432 = vmatprep.subr.bf16.mxu0 %v1222
    %1433 = vmatpush1.bf16.msra.mxu0 %v1221
    %1434 = vmatprep.subr.bf16.mxu0 %v1218
    %1435 = vmatpush1.bf16.msra.mxu0 %v1217
    %1436 = vmatprep.subr.bf16.mxu0 %v1214
    %1437 = vmatpush1.bf16.msra.mxu0 %v1213
    %1438 = vmatprep.subr.bf16.mxu0 %v1210
    %1439 = vmatpush1.bf16.msra.mxu0 %v1209
    %1440 = vmatprep.subr.bf16.mxu0 %v1206
    %1441 = vmatpush1.bf16.msra.mxu0 %v1205
    %1442 = vmatprep.subr.bf16.mxu0 %v1202
    %1443 = vmatpush1.bf16.msra.mxu0 %v1201
    %1444 = vmatprep.subr.bf16.mxu0 %v1198
    %1445 = vmatpush1.bf16.msra.mxu0 %v1197
    %1446 = vmatprep.subr.bf16.mxu0 %v1258
    %1447 = vmatpush2.bf16.msra.mxu0 %v1257
    %1448 = vmatprep.subr.bf16.mxu0 %v1254
    %1449 = vmatpush2.bf16.msra.mxu0 %v1253
    %1450 = vmatprep.subr.bf16.mxu0 %v1250
    %1451 = vmatpush2.bf16.msra.mxu0 %v1249
    %1452 = vmatprep.subr.bf16.mxu0 %v1246
    %1453 = vmatpush2.bf16.msra.mxu0 %v1245
    %1454 = vmatprep.subr.bf16.mxu0 %v1242
    %1455 = vmatpush2.bf16.msra.mxu0 %v1241
    %1456 = vmatprep.subr.bf16.mxu0 %v1238
    %1457 = vmatpush2.bf16.msra.mxu0 %v1237
    %1458 = vmatprep.subr.bf16.mxu0 %v1234
    %1459 = vmatpush2.bf16.msra.mxu0 %v1233
    %1460 = vmatprep.subr.bf16.mxu0 %v1230
    %1461 = vmatpush2.bf16.msra.mxu0 %v1229
    %1462 = vmatprep.mubr.bf16.mxu0 %v598
    %1463 = vmatmul.mubr.bf16.gmra.mxu0 %v597
    %v1464 = vpop.f32.mrf.mxu0
    %v1465 = vadd.f32 %v1424, %v1464
    %v1466 = vpop.f32.mrf.mxu0
    %v1467 = vadd.f32 %v1426, %v1466
    %v1468 = vpop.f32.mrf.mxu0
    %v1469 = vpop.f32.mrf.mxu0
    %1470 = vdwg.mxu0
    %1471 = vmatprep.subr.bf16.mxu0 %v1164
    %1472 = vmatpush1.bf16.msra.mxu0 %v1163
    %1473 = vmatprep.subr.bf16.mxu0 %v1160
    %1474 = vmatpush1.bf16.msra.mxu0 %v1159
    %1475 = vmatprep.subr.bf16.mxu0 %v1156
    %1476 = vmatpush1.bf16.msra.mxu0 %v1155
    %1477 = vmatprep.subr.bf16.mxu0 %v1152
    %1478 = vmatpush1.bf16.msra.mxu0 %v1151
    %1479 = vmatprep.subr.bf16.mxu0 %v1148
    %1480 = vmatpush1.bf16.msra.mxu0 %v1147
    %1481 = vmatprep.subr.bf16.mxu0 %v1144
    %1482 = vmatpush1.bf16.msra.mxu0 %v1143
    %1483 = vmatprep.subr.bf16.mxu0 %v1140
    %1484 = vmatpush1.bf16.msra.mxu0 %v1139
    %1485 = vmatprep.subr.bf16.mxu0 %v1136
    %1486 = vmatpush1.bf16.msra.mxu0 %v1135
    %1487 = vmatprep.subr.bf16.mxu0 %v1196
    %1488 = vmatpush2.bf16.msra.mxu0 %v1195
    %1489 = vmatprep.subr.bf16.mxu0 %v1192
    %1490 = vmatpush2.bf16.msra.mxu0 %v1191
    %1491 = vmatprep.subr.bf16.mxu0 %v1188
    %1492 = vmatpush2.bf16.msra.mxu0 %v1187
    %1493 = vmatprep.subr.bf16.mxu0 %v1184
    %1494 = vmatpush2.bf16.msra.mxu0 %v1183
    %1495 = vmatprep.subr.bf16.mxu0 %v1180
    %1496 = vmatpush2.bf16.msra.mxu0 %v1179
    %1497 = vmatprep.subr.bf16.mxu0 %v1176
    %1498 = vmatpush2.bf16.msra.mxu0 %v1175
    %1499 = vmatprep.subr.bf16.mxu0 %v1172
    %1500 = vmatpush2.bf16.msra.mxu0 %v1171
    %1501 = vmatprep.subr.bf16.mxu0 %v1168
    %1502 = vmatpush2.bf16.msra.mxu0 %v1167
    %1503 = vmatprep.mubr.bf16.mxu0 %v596
    %1504 = vmatmul.mubr.bf16.gmra.mxu0 %v595
    %v1505 = vpop.f32.mrf.mxu0
    %v1506 = vadd.f32 %v740, %v1505
    %v1507 = vpop.f32.mrf.mxu0
    %v1508 = vadd.f32 %v744, %v1507
    %v1509 = vpop.f32.mrf.mxu0
    %v1510 = vpop.f32.mrf.mxu0
    %1511 = vdwg.mxu0
    %1512 = vmatprep.subr.bf16.mxu0 %v1228
    %1513 = vmatpush1.bf16.msra.mxu0 %v1227
    %1514 = vmatprep.subr.bf16.mxu0 %v1224
    %1515 = vmatpush1.bf16.msra.mxu0 %v1223
    %1516 = vmatprep.subr.bf16.mxu0 %v1220
    %1517 = vmatpush1.bf16.msra.mxu0 %v1219
    %1518 = vmatprep.subr.bf16.mxu0 %v1216
    %1519 = vmatpush1.bf16.msra.mxu0 %v1215
    %1520 = vmatprep.subr.bf16.mxu0 %v1212
    %1521 = vmatpush1.bf16.msra.mxu0 %v1211
    %1522 = vmatprep.subr.bf16.mxu0 %v1208
    %1523 = vmatpush1.bf16.msra.mxu0 %v1207
    %1524 = vmatprep.subr.bf16.mxu0 %v1204
    %1525 = vmatpush1.bf16.msra.mxu0 %v1203
    %1526 = vmatprep.subr.bf16.mxu0 %v1200
    %1527 = vmatpush1.bf16.msra.mxu0 %v1199
    %1528 = vmatprep.subr.bf16.mxu0 %v1260
    %1529 = vmatpush2.bf16.msra.mxu0 %v1259
    %1530 = vmatprep.subr.bf16.mxu0 %v1256
    %1531 = vmatpush2.bf16.msra.mxu0 %v1255
    %1532 = vmatprep.subr.bf16.mxu0 %v1252
    %1533 = vmatpush2.bf16.msra.mxu0 %v1251
    %1534 = vmatprep.subr.bf16.mxu0 %v1248
    %1535 = vmatpush2.bf16.msra.mxu0 %v1247
    %1536 = vmatprep.subr.bf16.mxu0 %v1244
    %1537 = vmatpush2.bf16.msra.mxu0 %v1243
    %1538 = vmatprep.subr.bf16.mxu0 %v1240
    %1539 = vmatpush2.bf16.msra.mxu0 %v1239
    %1540 = vmatprep.subr.bf16.mxu0 %v1236
    %1541 = vmatpush2.bf16.msra.mxu0 %v1235
    %1542 = vmatprep.subr.bf16.mxu0 %v1232
    %1543 = vmatpush2.bf16.msra.mxu0 %v1231
    %1544 = vmatprep.mubr.bf16.mxu0 %v598
    %1545 = vmatmul.mubr.bf16.gmra.mxu0 %v597
    %v1546 = vpop.f32.mrf.mxu0
    %v1547 = vadd.f32 %v1506, %v1546
    %v1548 = vpop.f32.mrf.mxu0
    %v1549 = vadd.f32 %v1508, %v1548
    %v1550 = vpop.f32.mrf.mxu0
    %v1551 = vpop.f32.mrf.mxu0
    %1552 = vdwg.mxu0
    %vm1553 = vcmp.gt.f32.partialorder %v1465, 0.0
    %vm1554 = vcmp.gt.f32.partialorder %v1467, 0.0
    %vm1555 = vcmp.gt.f32.partialorder %v1547, 0.0
    %vm1556 = vcmp.gt.f32.partialorder %v1549, 0.0
    %v1557 = vmul.f32 %v1465, 0.1
    %v1558 = vmul.f32 %v1467, 0.1
    %v1559 = vmul.f32 %v1547, 0.1
    %v1560 = vmul.f32 %v1549, 0.1
    %v1561 = vsel %vm1553, %v1465, %v1557
    %v1562 = vsel %vm1554, %v1467, %v1558
    %v1563 = vsel %vm1555, %v1547, %v1559
    %v1564 = vsel %vm1556, %v1549, %v1560
    %v1565 = vpack.c.bf16 %v1561, %v1561
    %v1566 = vpack.c.bf16 %v1562, %v1562
    %v1567 = vpack.c.bf16 %v1563, %v1563
    %v1568 = vpack.c.bf16 %v1564, %v1564
    %v1569 = vld [vmem:[#allocation10] sm:$0xff]
    %v1570 = vld [vmem:[#allocation10 + $0x8] sm:$0xff]
    %v1571 = vld [vmem:[#allocation10 + $0x10] sm:$0xff]
    %v1572 = vld [vmem:[#allocation10 + $0x18] sm:$0xff]
    %v1573 = vld [vmem:[#allocation10 + $0x20] sm:$0xff]
    %v1574 = vld [vmem:[#allocation10 + $0x28] sm:$0xff]
    %v1575 = vld [vmem:[#allocation10 + $0x30] sm:$0xff]
    %v1576 = vld [vmem:[#allocation10 + $0x38] sm:$0xff]
    %v1577 = vld [vmem:[#allocation10 + $0x40] sm:$0xff]
    %v1578 = vld [vmem:[#allocation10 + $0x48] sm:$0xff]
    %v1579 = vld [vmem:[#allocation10 + $0x50] sm:$0xff]
    %v1580 = vld [vmem:[#allocation10 + $0x58] sm:$0xff]
    %v1581 = vld [vmem:[#allocation10 + $0x60] sm:$0xff]
    %v1582 = vld [vmem:[#allocation10 + $0x68] sm:$0xff]
    %v1583 = vld [vmem:[#allocation10 + $0x70] sm:$0xff]
    %v1584 = vld [vmem:[#allocation10 + $0x78] sm:$0xff]
    %v1585 = vld [vmem:[#allocation10 + $0x80] sm:$0xff]
    %v1586 = vld [vmem:[#allocation10 + $0x88] sm:$0xff]
    %v1587 = vld [vmem:[#allocation10 + $0x90] sm:$0xff]
    %v1588 = vld [vmem:[#allocation10 + $0x98] sm:$0xff]
    %v1589 = vld [vmem:[#allocation10 + $0xa0] sm:$0xff]
    %v1590 = vld [vmem:[#allocation10 + $0xa8] sm:$0xff]
    %v1591 = vld [vmem:[#allocation10 + $0xb0] sm:$0xff]
    %v1592 = vld [vmem:[#allocation10 + $0xb8] sm:$0xff]
    %v1593 = vld [vmem:[#allocation10 + $0xc0] sm:$0xff]
    %v1594 = vld [vmem:[#allocation10 + $0xc8] sm:$0xff]
    %v1595 = vld [vmem:[#allocation10 + $0xd0] sm:$0xff]
    %v1596 = vld [vmem:[#allocation10 + $0xd8] sm:$0xff]
    %v1597 = vld [vmem:[#allocation10 + $0xe0] sm:$0xff]
    %v1598 = vld [vmem:[#allocation10 + $0xe8] sm:$0xff]
    %v1599 = vld [vmem:[#allocation10 + $0xf0] sm:$0xff]
    %v1600 = vld [vmem:[#allocation10 + $0xf8] sm:$0xff]
    %v1601 = vld [vmem:[#allocation10 + $0x100] sm:$0xff]
    %v1602 = vld [vmem:[#allocation10 + $0x108] sm:$0xff]
    %v1603 = vld [vmem:[#allocation10 + $0x110] sm:$0xff]
    %v1604 = vld [vmem:[#allocation10 + $0x118] sm:$0xff]
    %v1605 = vld [vmem:[#allocation10 + $0x120] sm:$0xff]
    %v1606 = vld [vmem:[#allocation10 + $0x128] sm:$0xff]
    %v1607 = vld [vmem:[#allocation10 + $0x130] sm:$0xff]
    %v1608 = vld [vmem:[#allocation10 + $0x138] sm:$0xff]
    %v1609 = vld [vmem:[#allocation10 + $0x140] sm:$0xff]
    %v1610 = vld [vmem:[#allocation10 + $0x148] sm:$0xff]
    %v1611 = vld [vmem:[#allocation10 + $0x150] sm:$0xff]
    %v1612 = vld [vmem:[#allocation10 + $0x158] sm:$0xff]
    %v1613 = vld [vmem:[#allocation10 + $0x160] sm:$0xff]
    %v1614 = vld [vmem:[#allocation10 + $0x168] sm:$0xff]
    %v1615 = vld [vmem:[#allocation10 + $0x170] sm:$0xff]
    %v1616 = vld [vmem:[#allocation10 + $0x178] sm:$0xff]
    %v1617 = vld [vmem:[#allocation10 + $0x180] sm:$0xff]
    %v1618 = vld [vmem:[#allocation10 + $0x188] sm:$0xff]
    %v1619 = vld [vmem:[#allocation10 + $0x190] sm:$0xff]
    %v1620 = vld [vmem:[#allocation10 + $0x198] sm:$0xff]
    %v1621 = vld [vmem:[#allocation10 + $0x1a0] sm:$0xff]
    %v1622 = vld [vmem:[#allocation10 + $0x1a8] sm:$0xff]
    %v1623 = vld [vmem:[#allocation10 + $0x1b0] sm:$0xff]
    %v1624 = vld [vmem:[#allocation10 + $0x1b8] sm:$0xff]
    %v1625 = vld [vmem:[#allocation10 + $0x1c0] sm:$0xff]
    %v1626 = vld [vmem:[#allocation10 + $0x1c8] sm:$0xff]
    %v1627 = vld [vmem:[#allocation10 + $0x1d0] sm:$0xff]
    %v1628 = vld [vmem:[#allocation10 + $0x1d8] sm:$0xff]
    %v1629 = vld [vmem:[#allocation10 + $0x1e0] sm:$0xff]
    %v1630 = vld [vmem:[#allocation10 + $0x1e8] sm:$0xff]
    %v1631 = vld [vmem:[#allocation10 + $0x1f0] sm:$0xff]
    %v1632 = vld [vmem:[#allocation10 + $0x1f8] sm:$0xff]
    %v1633 = vld [vmem:[%s6] sm:$0x3]
    %v1635 = vlaneseq
    %v1636 = vshrl.u32 %v1635, 7
    %v1637 = vsub.s32 0, %v1636
    %v1638 = vrot.slane %v1633, %v1637
    %v1639 = vlaneseq
    %v1640 = vshrl.u32 %v1639, 7
    %v1641 = vsub.s32 1, %v1640
    %v1642 = vrot.slane %v1633, %v1641
    %v1709 = vunpack.c.l.b16 %v1569
    %v1710 = vunpack.c.h.b16 %v1569
    %v1711 = vunpack.c.l.b16 %v1570
    %v1712 = vunpack.c.h.b16 %v1570
    %v1713 = vunpack.c.l.b16 %v1571
    %v1714 = vunpack.c.h.b16 %v1571
    %v1715 = vunpack.c.l.b16 %v1572
    %v1716 = vunpack.c.h.b16 %v1572
    %v1717 = vunpack.c.l.b16 %v1573
    %v1718 = vunpack.c.h.b16 %v1573
    %v1719 = vunpack.c.l.b16 %v1574
    %v1720 = vunpack.c.h.b16 %v1574
    %v1721 = vunpack.c.l.b16 %v1575
    %v1722 = vunpack.c.h.b16 %v1575
    %v1723 = vunpack.c.l.b16 %v1576
    %v1724 = vunpack.c.h.b16 %v1576
    %v1725 = vunpack.c.l.b16 %v1577
    %v1726 = vunpack.c.h.b16 %v1577
    %v1727 = vunpack.c.l.b16 %v1578
    %v1728 = vunpack.c.h.b16 %v1578
    %v1729 = vunpack.c.l.b16 %v1579
    %v1730 = vunpack.c.h.b16 %v1579
    %v1731 = vunpack.c.l.b16 %v1580
    %v1732 = vunpack.c.h.b16 %v1580
    %v1733 = vunpack.c.l.b16 %v1581
    %v1734 = vunpack.c.h.b16 %v1581
    %v1735 = vunpack.c.l.b16 %v1582
    %v1736 = vunpack.c.h.b16 %v1582
    %v1737 = vunpack.c.l.b16 %v1583
    %v1738 = vunpack.c.h.b16 %v1583
    %v1739 = vunpack.c.l.b16 %v1584
    %v1740 = vunpack.c.h.b16 %v1584
    %v1741 = vunpack.c.l.b16 %v1585
    %v1742 = vunpack.c.h.b16 %v1585
    %v1743 = vunpack.c.l.b16 %v1586
    %v1744 = vunpack.c.h.b16 %v1586
    %v1745 = vunpack.c.l.b16 %v1587
    %v1746 = vunpack.c.h.b16 %v1587
    %v1747 = vunpack.c.l.b16 %v1588
    %v1748 = vunpack.c.h.b16 %v1588
    %v1749 = vunpack.c.l.b16 %v1589
    %v1750 = vunpack.c.h.b16 %v1589
    %v1751 = vunpack.c.l.b16 %v1590
    %v1752 = vunpack.c.h.b16 %v1590
    %v1753 = vunpack.c.l.b16 %v1591
    %v1754 = vunpack.c.h.b16 %v1591
    %v1755 = vunpack.c.l.b16 %v1592
    %v1756 = vunpack.c.h.b16 %v1592
    %v1757 = vunpack.c.l.b16 %v1593
    %v1758 = vunpack.c.h.b16 %v1593
    %v1759 = vunpack.c.l.b16 %v1594
    %v1760 = vunpack.c.h.b16 %v1594
    %v1761 = vunpack.c.l.b16 %v1595
    %v1762 = vunpack.c.h.b16 %v1595
    %v1763 = vunpack.c.l.b16 %v1596
    %v1764 = vunpack.c.h.b16 %v1596
    %v1765 = vunpack.c.l.b16 %v1597
    %v1766 = vunpack.c.h.b16 %v1597
    %v1767 = vunpack.c.l.b16 %v1598
    %v1768 = vunpack.c.h.b16 %v1598
    %v1769 = vunpack.c.l.b16 %v1599
    %v1770 = vunpack.c.h.b16 %v1599
    %v1771 = vunpack.c.l.b16 %v1600
    %v1772 = vunpack.c.h.b16 %v1600
    %v1773 = vunpack.c.l.b16 %v1601
    %v1774 = vunpack.c.h.b16 %v1601
    %v1775 = vunpack.c.l.b16 %v1602
    %v1776 = vunpack.c.h.b16 %v1602
    %v1777 = vunpack.c.l.b16 %v1603
    %v1778 = vunpack.c.h.b16 %v1603
    %v1779 = vunpack.c.l.b16 %v1604
    %v1780 = vunpack.c.h.b16 %v1604
    %v1781 = vunpack.c.l.b16 %v1605
    %v1782 = vunpack.c.h.b16 %v1605
    %v1783 = vunpack.c.l.b16 %v1606
    %v1784 = vunpack.c.h.b16 %v1606
    %v1785 = vunpack.c.l.b16 %v1607
    %v1786 = vunpack.c.h.b16 %v1607
    %v1787 = vunpack.c.l.b16 %v1608
    %v1788 = vunpack.c.h.b16 %v1608
    %v1789 = vunpack.c.l.b16 %v1609
    %v1790 = vunpack.c.h.b16 %v1609
    %v1791 = vunpack.c.l.b16 %v1610
    %v1792 = vunpack.c.h.b16 %v1610
    %v1793 = vunpack.c.l.b16 %v1611
    %v1794 = vunpack.c.h.b16 %v1611
    %v1795 = vunpack.c.l.b16 %v1612
    %v1796 = vunpack.c.h.b16 %v1612
    %v1797 = vunpack.c.l.b16 %v1613
    %v1798 = vunpack.c.h.b16 %v1613
    %v1799 = vunpack.c.l.b16 %v1614
    %v1800 = vunpack.c.h.b16 %v1614
    %v1801 = vunpack.c.l.b16 %v1615
    %v1802 = vunpack.c.h.b16 %v1615
    %v1803 = vunpack.c.l.b16 %v1616
    %v1804 = vunpack.c.h.b16 %v1616
    %v1805 = vunpack.c.l.b16 %v1617
    %v1806 = vunpack.c.h.b16 %v1617
    %v1807 = vunpack.c.l.b16 %v1618
    %v1808 = vunpack.c.h.b16 %v1618
    %v1809 = vunpack.c.l.b16 %v1619
    %v1810 = vunpack.c.h.b16 %v1619
    %v1811 = vunpack.c.l.b16 %v1620
    %v1812 = vunpack.c.h.b16 %v1620
    %v1813 = vunpack.c.l.b16 %v1621
    %v1814 = vunpack.c.h.b16 %v1621
    %v1815 = vunpack.c.l.b16 %v1622
    %v1816 = vunpack.c.h.b16 %v1622
    %v1817 = vunpack.c.l.b16 %v1623
    %v1818 = vunpack.c.h.b16 %v1623
    %v1819 = vunpack.c.l.b16 %v1624
    %v1820 = vunpack.c.h.b16 %v1624
    %v1821 = vunpack.c.l.b16 %v1625
    %v1822 = vunpack.c.h.b16 %v1625
    %v1823 = vunpack.c.l.b16 %v1626
    %v1824 = vunpack.c.h.b16 %v1626
    %v1825 = vunpack.c.l.b16 %v1627
    %v1826 = vunpack.c.h.b16 %v1627
    %v1827 = vunpack.c.l.b16 %v1628
    %v1828 = vunpack.c.h.b16 %v1628
    %v1829 = vunpack.c.l.b16 %v1629
    %v1830 = vunpack.c.h.b16 %v1629
    %v1831 = vunpack.c.l.b16 %v1630
    %v1832 = vunpack.c.h.b16 %v1630
    %v1833 = vunpack.c.l.b16 %v1631
    %v1834 = vunpack.c.h.b16 %v1631
    %v1835 = vunpack.c.l.b16 %v1632
    %v1836 = vunpack.c.h.b16 %v1632
    %v1837 = vpack.c.b16 %v1711, %v1709
    %v1838 = vpack.c.b16 %v1712, %v1710
    %v1839 = vpack.c.b16 %v1715, %v1713
    %v1840 = vpack.c.b16 %v1716, %v1714
    %v1841 = vpack.c.b16 %v1719, %v1717
    %v1842 = vpack.c.b16 %v1720, %v1718
    %v1843 = vpack.c.b16 %v1723, %v1721
    %v1844 = vpack.c.b16 %v1724, %v1722
    %v1845 = vpack.c.b16 %v1727, %v1725
    %v1846 = vpack.c.b16 %v1728, %v1726
    %v1847 = vpack.c.b16 %v1731, %v1729
    %v1848 = vpack.c.b16 %v1732, %v1730
    %v1849 = vpack.c.b16 %v1735, %v1733
    %v1850 = vpack.c.b16 %v1736, %v1734
    %v1851 = vpack.c.b16 %v1739, %v1737
    %v1852 = vpack.c.b16 %v1740, %v1738
    %v1853 = vpack.c.b16 %v1743, %v1741
    %v1854 = vpack.c.b16 %v1744, %v1742
    %v1855 = vpack.c.b16 %v1747, %v1745
    %v1856 = vpack.c.b16 %v1748, %v1746
    %v1857 = vpack.c.b16 %v1751, %v1749
    %v1858 = vpack.c.b16 %v1752, %v1750
    %v1859 = vpack.c.b16 %v1755, %v1753
    %v1860 = vpack.c.b16 %v1756, %v1754
    %v1861 = vpack.c.b16 %v1759, %v1757
    %v1862 = vpack.c.b16 %v1760, %v1758
    %v1863 = vpack.c.b16 %v1763, %v1761
    %v1864 = vpack.c.b16 %v1764, %v1762
    %v1865 = vpack.c.b16 %v1767, %v1765
    %v1866 = vpack.c.b16 %v1768, %v1766
    %v1867 = vpack.c.b16 %v1771, %v1769
    %v1868 = vpack.c.b16 %v1772, %v1770
    %v1869 = vpack.c.b16 %v1775, %v1773
    %v1870 = vpack.c.b16 %v1776, %v1774
    %v1871 = vpack.c.b16 %v1779, %v1777
    %v1872 = vpack.c.b16 %v1780, %v1778
    %v1873 = vpack.c.b16 %v1783, %v1781
    %v1874 = vpack.c.b16 %v1784, %v1782
    %v1875 = vpack.c.b16 %v1787, %v1785
    %v1876 = vpack.c.b16 %v1788, %v1786
    %v1877 = vpack.c.b16 %v1791, %v1789
    %v1878 = vpack.c.b16 %v1792, %v1790
    %v1879 = vpack.c.b16 %v1795, %v1793
    %v1880 = vpack.c.b16 %v1796, %v1794
    %v1881 = vpack.c.b16 %v1799, %v1797
    %v1882 = vpack.c.b16 %v1800, %v1798
    %v1883 = vpack.c.b16 %v1803, %v1801
    %v1884 = vpack.c.b16 %v1804, %v1802
    %v1885 = vpack.c.b16 %v1807, %v1805
    %v1886 = vpack.c.b16 %v1808, %v1806
    %v1887 = vpack.c.b16 %v1811, %v1809
    %v1888 = vpack.c.b16 %v1812, %v1810
    %v1889 = vpack.c.b16 %v1815, %v1813
    %v1890 = vpack.c.b16 %v1816, %v1814
    %v1891 = vpack.c.b16 %v1819, %v1817
    %v1892 = vpack.c.b16 %v1820, %v1818
    %v1893 = vpack.c.b16 %v1823, %v1821
    %v1894 = vpack.c.b16 %v1824, %v1822
    %v1895 = vpack.c.b16 %v1827, %v1825
    %v1896 = vpack.c.b16 %v1828, %v1826
    %v1897 = vpack.c.b16 %v1831, %v1829
    %v1898 = vpack.c.b16 %v1832, %v1830
    %v1899 = vpack.c.b16 %v1835, %v1833
    %v1900 = vpack.c.b16 %v1836, %v1834
    %1965 = vmatprep.subr.bf16.mxu0 %v1852
    %1966 = vmatpush1.bf16.msra.mxu0 %v1851
    %1967 = vmatprep.subr.bf16.mxu0 %v1850
    %1968 = vmatpush1.bf16.msra.mxu0 %v1849
    %1969 = vmatprep.subr.bf16.mxu0 %v1848
    %1970 = vmatpush1.bf16.msra.mxu0 %v1847
    %1971 = vmatprep.subr.bf16.mxu0 %v1846
    %1972 = vmatpush1.bf16.msra.mxu0 %v1845
    %1973 = vmatprep.subr.bf16.mxu0 %v1844
    %1974 = vmatpush1.bf16.msra.mxu0 %v1843
    %1975 = vmatprep.subr.bf16.mxu0 %v1842
    %1976 = vmatpush1.bf16.msra.mxu0 %v1841
    %1977 = vmatprep.subr.bf16.mxu0 %v1840
    %1978 = vmatpush1.bf16.msra.mxu0 %v1839
    %1979 = vmatprep.subr.bf16.mxu0 %v1838
    %1980 = vmatpush1.bf16.msra.mxu0 %v1837
    %1981 = vmatprep.subr.bf16.mxu0 %v1868
    %1982 = vmatpush2.bf16.msra.mxu0 %v1867
    %1983 = vmatprep.subr.bf16.mxu0 %v1866
    %1984 = vmatpush2.bf16.msra.mxu0 %v1865
    %1985 = vmatprep.subr.bf16.mxu0 %v1864
    %1986 = vmatpush2.bf16.msra.mxu0 %v1863
    %1987 = vmatprep.subr.bf16.mxu0 %v1862
    %1988 = vmatpush2.bf16.msra.mxu0 %v1861
    %1989 = vmatprep.subr.bf16.mxu0 %v1860
    %1990 = vmatpush2.bf16.msra.mxu0 %v1859
    %1991 = vmatprep.subr.bf16.mxu0 %v1858
    %1992 = vmatpush2.bf16.msra.mxu0 %v1857
    %1993 = vmatprep.subr.bf16.mxu0 %v1856
    %1994 = vmatpush2.bf16.msra.mxu0 %v1855
    %1995 = vmatprep.subr.bf16.mxu0 %v1854
    %1996 = vmatpush2.bf16.msra.mxu0 %v1853
    %1997 = vmatprep.mubr.bf16.mxu0 %v1566
    %1998 = vmatmul.mubr.bf16.gmra.mxu0 %v1565
    %v1999 = vpop.f32.mrf.mxu0
    %v2000 = vadd.f32 %v1638, %v1999
    %v2001 = vpop.f32.mrf.mxu0
    %v2002 = vadd.f32 %v1642, %v2001
    %v2003 = vpop.f32.mrf.mxu0
    %v2004 = vpop.f32.mrf.mxu0
    %2005 = vdwg.mxu0
    %2006 = vmatprep.subr.bf16.mxu0 %v1884
    %2007 = vmatpush1.bf16.msra.mxu0 %v1883
    %2008 = vmatprep.subr.bf16.mxu0 %v1882
    %2009 = vmatpush1.bf16.msra.mxu0 %v1881
    %2010 = vmatprep.subr.bf16.mxu0 %v1880
    %2011 = vmatpush1.bf16.msra.mxu0 %v1879
    %2012 = vmatprep.subr.bf16.mxu0 %v1878
    %2013 = vmatpush1.bf16.msra.mxu0 %v1877
    %2014 = vmatprep.subr.bf16.mxu0 %v1876
    %2015 = vmatpush1.bf16.msra.mxu0 %v1875
    %2016 = vmatprep.subr.bf16.mxu0 %v1874
    %2017 = vmatpush1.bf16.msra.mxu0 %v1873
    %2018 = vmatprep.subr.bf16.mxu0 %v1872
    %2019 = vmatpush1.bf16.msra.mxu0 %v1871
    %2020 = vmatprep.subr.bf16.mxu0 %v1870
    %2021 = vmatpush1.bf16.msra.mxu0 %v1869
    %2022 = vmatprep.subr.bf16.mxu0 %v1900
    %2023 = vmatpush2.bf16.msra.mxu0 %v1899
    %2024 = vmatprep.subr.bf16.mxu0 %v1898
    %2025 = vmatpush2.bf16.msra.mxu0 %v1897
    %2026 = vmatprep.subr.bf16.mxu0 %v1896
    %2027 = vmatpush2.bf16.msra.mxu0 %v1895
    %2028 = vmatprep.subr.bf16.mxu0 %v1894
    %2029 = vmatpush2.bf16.msra.mxu0 %v1893
    %2030 = vmatprep.subr.bf16.mxu0 %v1892
    %2031 = vmatpush2.bf16.msra.mxu0 %v1891
    %2032 = vmatprep.subr.bf16.mxu0 %v1890
    %2033 = vmatpush2.bf16.msra.mxu0 %v1889
    %2034 = vmatprep.subr.bf16.mxu0 %v1888
    %2035 = vmatpush2.bf16.msra.mxu0 %v1887
    %2036 = vmatprep.subr.bf16.mxu0 %v1886
    %2037 = vmatpush2.bf16.msra.mxu0 %v1885
    %2038 = vmatprep.mubr.bf16.mxu0 %v1568
    %2039 = vmatmul.mubr.bf16.gmra.mxu0 %v1567
    %v2040 = vpop.f32.mrf.mxu0
    %v2041 = vadd.f32 %v2000, %v2040
    %v2042 = vpop.f32.mrf.mxu0
    %v2043 = vadd.f32 %v2002, %v2042
    %v2044 = vpop.f32.mrf.mxu0
    %v2045 = vpop.f32.mrf.mxu0
    %2046 = vdwg.mxu0
    %2047 = vst [vmem:[#allocation11] sm:$0xff] %v2041
    %2048 = vst [vmem:[#allocation11 + $0x8] sm:$0xff] %v2043
    // Predicated region
    $region50: #{tpu_custom_call.1} parent=1 // pred_check
      _
    $region51: #{tpu_custom_call.1} parent=1 // pred_check_branch
      %2050 = sbr.rel (0) target = $region53
    $region52: #{tpu_custom_call.1} parent=1 // pred_region
      %s2052 = ssub.s32 256, 256
      %2053 = vsyncadd [#allocation4], %s2052
      %s2055 = sshll.u32 [#allocation11], 4
      %s2056 = int_to_ptr.vmem [resolvable:$true] %s2055
      %2058 = dma.vmem_to_hbm [thread:$0]  %s2056, 256, %s7, [#allocation4]
    $region53: #{tpu_custom_call.1} parent=1 // pred_fallthru
      _
    // Predicated region
    $region54: #{tpu_custom_call.1} parent=1 // pred_check
      _
    $region55: #{tpu_custom_call.1} parent=1 // pred_check_branch
      %2060 = sbr.rel (0) target = $region57
    $region56: #{tpu_custom_call.1} parent=1 // pred_region
      %2061 = dma.done [#allocation4], 256
    $region57: #{tpu_custom_call.1} parent=1 // pred_fallthru
      _
    %2062 = vsyncpa [#allocation3], 1
    %2063 = vsyncpa [#allocation6], 1
    %2064 = vsyncpa [#allocation9], 1
    %2065 = vsyncpa [#allocation4], 1

</llo_original>
